<compile_context>
chip_gen: v5e
topology: v5e:2x2
jax: 0.10.0
libtpu: 0.0.40
codegen_flags: <defaults>
</compile_context>

<pallas_src>
import functools

import jax
import jax.numpy as jnp
from jax import lax
from jax.experimental import pallas as pl
from jax.experimental.pallas import tpu as pltpu


def lstm_rnn_kernel(x_ref, w1_ref, b1_ref, gamma_ref, beta_ref,
                    wih0_ref, whh0_ref, bl0_ref,
                    wcat1_ref, bl1_ref,
                    wcat2_ref, bl2_ref,
                    w2_ref, b2_ref,
                    out_ref,
                    *, T, B, B_pad):
    H = whh0_ref.shape[0]
    f32 = jnp.float32
    bf16 = jnp.bfloat16
    eps = 1e-5

    # ---- dense1: one matmul over the flattened (padded) sequence ------------
    d1 = (jnp.dot(x_ref[...], w1_ref[...], preferred_element_type=f32)
          + b1_ref[...])                                      # (T*B_pad, Hd) f32

    # ---- BatchNorm1d (training-mode batch stats over the T*B REAL rows) -----
    # Padded batch rows of x are exactly zero, so their dense1 output is
    # exactly b1; remove that contribution from the sums analytically instead
    # of masking.  Variance is clamped before rsqrt (single-pass cancellation).
    n_real = jnp.float32(T * B)
    n_pad = jnp.float32(T * (B_pad - B))
    b1 = b1_ref[...]
    sum1 = jnp.sum(d1, axis=0, keepdims=True)                 # (1, Hd)
    sum2 = jnp.sum(d1 * d1, axis=0, keepdims=True)
    mean = (sum1 - n_pad * b1) / n_real
    ex2 = (sum2 - n_pad * (b1 * b1)) / n_real
    var = jnp.maximum(ex2 - mean * mean, 0.0)                 # biased, like PyTorch
    scale = gamma_ref[...] * lax.rsqrt(var + eps)
    shift = beta_ref[...] - mean * scale
    d1 = d1 * scale + shift                                   # single FMA pass

    # ---- layer-0 input projection hoisted off the recurrence -----------------
    gates_in0 = (jnp.dot(d1.astype(bf16), wih0_ref[...],
                         preferred_element_type=f32)
                 + bl0_ref[...])                              # (T*B_pad, 4H) f32

    whh0 = whh0_ref[...]                                      # (H, 4H)   bf16
    wcat1 = wcat1_ref[...]                                    # (2H, 4H)  bf16
    wcat2 = wcat2_ref[...]                                    # (2H, 4H)  bf16
    bl1 = bl1_ref[...]
    bl2 = bl2_ref[...]

    # Gate columns are (i, f, o, g).  Pre-scaling the sigmoid columns by 0.5
    # lets a SINGLE full-width tanh serve all four gates:
    #   sigmoid(z) = 0.5 * (tanh(z/2) + 1),  tanh(z) = tanh(z).
    col = lax.broadcasted_iota(jnp.int32, (1, 4 * H), 1)
    half = jnp.where(col < 3 * H, jnp.float32(0.5), jnp.float32(1.0))  # (1,4H)

    def cell(gates, c_prev):
        t = jnp.tanh(gates * half)                            # one EUP push/step
        ifo = 0.5 * t[:, :3 * H] + 0.5                        # i, f, o (VPU FMA)
        g = t[:, 3 * H:]
        i = ifo[:, :H]
        f = ifo[:, H:2 * H]
        o = ifo[:, 2 * H:3 * H]
        c = f * c_prev + i * g
        h = o * jnp.tanh(c)
        return h, c

    zeros = jnp.zeros((B_pad, H), f32)
    h0, c0 = zeros, zeros
    h1, c1 = zeros, zeros
    h2, c2 = zeros, zeros
    h_max = None

    # ---- wavefront over the 3 stacked LSTM layers ----------------------------
    # Step s runs (layer0, t=s), (layer1, t=s-1), (layer2, t=s-2); each active
    # cell only reads state produced at step s-1, so the three matmul->EUP->VPU
    # chains within a step are independent (LLO can overlap them) and the
    # dependent chain length is T+2, not 3*T.  T is small and static: unroll.
    # TODO(synk): if the bundle dump shows whh re-latched every step, drive the
    # MXU explicitly (matmul_push_rhs once per layer / matmul_acc_lhs per step).
    for s in range(T + 2):
        nh0, nc0, nh1, nc1, nh2, nc2 = h0, c0, h1, c1, h2, c2
        if s < T:                                             # layer 0, t = s
            g = gates_in0[s * B_pad:(s + 1) * B_pad, :]       # whole (8,128) tile
            if s > 0:                                         # zero initial state
                g = g + jnp.dot(h0.astype(bf16), whh0,
                                preferred_element_type=f32)
            nh0, nc0 = cell(g, c0)
        if 1 <= s <= T:                                       # layer 1, t = s-1
            xcat = jnp.concatenate([h0, h1], axis=1).astype(bf16)   # [x_t ; h_{t-1}]
            g = jnp.dot(xcat, wcat1, preferred_element_type=f32) + bl1
            nh1, nc1 = cell(g, c1)
        if 2 <= s <= T + 1:                                   # layer 2, t = s-2
            xcat = jnp.concatenate([h1, h2], axis=1).astype(bf16)
            g = jnp.dot(xcat, wcat2, preferred_element_type=f32) + bl2
            nh2, nc2 = cell(g, c2)
            h_max = nh2 if h_max is None else jnp.maximum(h_max, nh2)
        h0, c0, h1, c1, h2, c2 = nh0, nc0, nh1, nc1, nh2, nc2

    # ---- dense2 (only the real batch rows are written out) -------------------
    out = (jnp.dot(h_max.astype(bf16), w2_ref[...],
                   preferred_element_type=f32) + b2_ref[...])
    out_ref[...] = out[:B, :]


def prepare_params(params):
    """One-time prep: permute gate columns to (i, f, o, g), fuse [wih; whh] for
    layers 1/2, cast matmul operands to bf16.  Call once, reuse every forward."""
    f32, bf16 = jnp.float32, jnp.bfloat16
    H = params["whh0"].shape[0]
    perm = jnp.concatenate([jnp.arange(0, 2 * H),             # i, f
                            jnp.arange(3 * H, 4 * H),         # o
                            jnp.arange(2 * H, 3 * H)])        # g

    def reorder(w):
        return w[..., perm]

    return {
        "w1": params["w1"].astype(bf16),
        "b1": params["b1"].astype(f32),
        "gamma": params["gamma"].astype(f32),
        "beta": params["beta"].astype(f32),
        "wih0": reorder(params["wih0"]).astype(bf16),
        "whh0": reorder(params["whh0"]).astype(bf16),
        "bl0": reorder(params["bl0"]).astype(f32),
        "wcat1": jnp.concatenate([reorder(params["wih1"]),
                                  reorder(params["whh1"])], axis=0).astype(bf16),
        "bl1": reorder(params["bl1"]).astype(f32),
        "wcat2": jnp.concatenate([reorder(params["wih2"]),
                                  reorder(params["whh2"])], axis=0).astype(bf16),
        "bl2": reorder(params["bl2"]).astype(f32),
        "w2": params["w2"].astype(bf16),
        "b2": params["b2"].astype(f32),
    }


def lstm_rnn_forward(x, prep):
    B, T, D = x.shape
    H = prep["whh0"].shape[0]
    C = prep["w2"].shape[1]
    f32, bf16 = jnp.float32, jnp.bfloat16
    B_pad = max(8, ((B + 7) // 8) * 8)     # f32 sublane multiple

    # Time-major, batch padded with zero rows so every per-step slice inside
    # the kernel is a whole (8, 128) tile.
    x_tm = jnp.transpose(x, (1, 0, 2))                        # (T, B, D)
    x_tm = jnp.pad(x_tm, ((0, 0), (0, B_pad - B), (0, 0)))
    x2d = x_tm.reshape(T * B_pad, D).astype(bf16)

    kernel_args = (
        x2d,
        prep["w1"], prep["b1"], prep["gamma"], prep["beta"],
        prep["wih0"], prep["whh0"], prep["bl0"],
        prep["wcat1"], prep["bl1"],
        prep["wcat2"], prep["bl2"],
        prep["w2"], prep["b2"],
    )

    vmem_spec = pl.BlockSpec(memory_space=pltpu.MemorySpace.VMEM)
    kernel = functools.partial(lstm_rnn_kernel, T=T, B=B, B_pad=B_pad)
    # Note: at production sizes, add a batch grid axis with
    # dimension_semantics=("parallel",) (2 TensorCores on v7x, zero cross-TC
    # traffic since LSTM state is per-sample), block the hoisted projections
    # over T via BlockSpec, and set vmem_limit_bytes for v7x's 64 MiB VMEM.
    # At B=2 / T=8 / H=32 everything fits in one invocation.
    return pl.pallas_call(
        kernel,
        out_shape=jax.ShapeDtypeStruct((B, C), f32),
        in_specs=[vmem_spec] * len(kernel_args),
        out_specs=vmem_spec,
    )(*kernel_args)


def init_params(key, input_size, dense_units, lstm_units, num_classes):
    ks = jax.random.split(key, 16)
    s = 0.1
    H = lstm_units
    return {
        # dense1: PyTorch weight (Hd, D) stored transposed as (D, Hd)
        "w1": s * jax.random.normal(ks[0], (input_size, dense_units), jnp.float32),
        "b1": s * jax.random.normal(ks[1], (1, dense_units), jnp.float32),
        # BatchNorm1d affine params
        "gamma": 1.0 + s * jax.random.normal(ks[2], (1, dense_units), jnp.float32),
        "beta": s * jax.random.normal(ks[3], (1, dense_units), jnp.float32),
        # LSTM layer 0 (input dim = dense_units); biases b_ih + b_hh fused.
        # Gate order here is PyTorch-style (i, f, g, o); prepare_params permutes.
        "wih0": s * jax.random.normal(ks[4], (dense_units, 4 * H), jnp.float32),
        "whh0": s * jax.random.normal(ks[5], (H, 4 * H), jnp.float32),
        "bl0": s * jax.random.normal(ks[6], (1, 4 * H), jnp.float32),
        # LSTM layers 1, 2 (input dim = lstm_units)
        "wih1": s * jax.random.normal(ks[7], (H, 4 * H), jnp.float32),
        "whh1": s * jax.random.normal(ks[8], (H, 4 * H), jnp.float32),
        "bl1": s * jax.random.normal(ks[9], (1, 4 * H), jnp.float32),
        "wih2": s * jax.random.normal(ks[10], (H, 4 * H), jnp.float32),
        "whh2": s * jax.random.normal(ks[11], (H, 4 * H), jnp.float32),
        "bl2": s * jax.random.normal(ks[12], (1, 4 * H), jnp.float32),
        # dense2: PyTorch weight (C, H) stored transposed as (H, C)
        "w2": s * jax.random.normal(ks[13], (H, num_classes), jnp.float32),
        "b2": s * jax.random.normal(ks[14], (1, num_classes), jnp.float32),
    }


def reference_forward(x, params):
    """Pure-JAX f32 reference mirroring the PyTorch forward (i, f, g, o order)."""
    B, T, _ = x.shape
    H = params["whh0"].shape[0]
    d1 = jnp.einsum("btd,dh->bth", x, params["w1"]) + params["b1"][0]
    flat = d1.reshape(B * T, -1)
    mean = flat.mean(axis=0)
    var = flat.var(axis=0)  # biased, like PyTorch BN normalization in training mode
    flat = ((flat - mean) / jnp.sqrt(var + 1e-5)
            * params["gamma"][0] + params["beta"][0])
    seq = flat.reshape(B, T, -1)
    for l in range(3):
        wih, whh, b = params[f"wih{l}"], params[f"whh{l}"], params[f"bl{l}"]
        h = jnp.zeros((B, H), jnp.float32)
        c = jnp.zeros((B, H), jnp.float32)
        outs = []
        for t in range(T):
            gates = seq[:, t] @ wih + h @ whh + b[0]
            i = jax.nn.sigmoid(gates[:, :H])
            f = jax.nn.sigmoid(gates[:, H:2 * H])
            g = jnp.tanh(gates[:, 2 * H:3 * H])
            o = jax.nn.sigmoid(gates[:, 3 * H:])
            c = f * c + i * g
            h = o * jnp.tanh(c)
            outs.append(h)
        seq = jnp.stack(outs, axis=1)
    h_max = seq.max(axis=1)
    return h_max @ params["w2"] + params["b2"][0]


if __name__ == "__main__":
    input_size, dense_units, lstm_units, num_classes = 16, 32, 32, 4
    B, T = 2, 8

    key = jax.random.PRNGKey(0)
    k_x, k_p = jax.random.split(key)
    x = jax.random.normal(k_x, (B, T, input_size), jnp.float32)
    params = init_params(k_p, input_size, dense_units, lstm_units, num_classes)
    prep = prepare_params(params)   # one-time: reorder / fuse / cast weights

    out = jax.block_until_ready(lstm_rnn_forward(x, prep))
    ref = jax.block_until_ready(reference_forward(x, params))

    assert out.shape == (B, num_classes)
    # bf16 matmul operands (f32 accumulation) vs. pure-f32 reference.
    assert jnp.allclose(out, ref, rtol=2e-2, atol=2e-2), (out, ref)

    print("KERNEL_OK")
</pallas_src>

<mosaic_0001>
module attributes {stable_mosaic.version = 11 : i64} {
  func.func @lstm_rnn_kernel(%arg0: memref<64x16xbf16, #tpu.memory_space<vmem>>, %arg1: memref<16x32xbf16, #tpu.memory_space<vmem>>, %arg2: memref<1x32xf32, #tpu.memory_space<vmem>>, %arg3: memref<1x32xf32, #tpu.memory_space<vmem>>, %arg4: memref<1x32xf32, #tpu.memory_space<vmem>>, %arg5: memref<32x128xbf16, #tpu.memory_space<vmem>>, %arg6: memref<32x128xbf16, #tpu.memory_space<vmem>>, %arg7: memref<1x128xf32, #tpu.memory_space<vmem>>, %arg8: memref<64x128xbf16, #tpu.memory_space<vmem>>, %arg9: memref<1x128xf32, #tpu.memory_space<vmem>>, %arg10: memref<64x128xbf16, #tpu.memory_space<vmem>>, %arg11: memref<1x128xf32, #tpu.memory_space<vmem>>, %arg12: memref<32x4xbf16, #tpu.memory_space<vmem>>, %arg13: memref<1x4xf32, #tpu.memory_space<vmem>>, %arg14: memref<2x4xf32, #tpu.memory_space<vmem>>) attributes {dimension_semantics = [], scalar_prefetch = 0 : i64, scratch_operands = 0 : i64, tpu.core_type = #tpu.core_type<tc>} {
    %c0 = arith.constant 0 : index
    %c0_0 = arith.constant 0 : index
    %0 = vector.load %arg0[%c0, %c0_0] : memref<64x16xbf16, #tpu.memory_space<vmem>>, vector<64x16xbf16>
    %c0_1 = arith.constant 0 : index
    %c0_2 = arith.constant 0 : index
    %1 = vector.load %arg1[%c0_1, %c0_2] : memref<16x32xbf16, #tpu.memory_space<vmem>>, vector<16x32xbf16>
    %cst = arith.constant dense<0.000000e+00> : vector<64x32xf32>
    %2 = tpu.matmul %0, %1, %cst {dimension_numbers = #tpu.dot_dimension_numbers<[1], [0], [0], [1], [0, 0, 1, 1], [], []>} : vector<64x16xbf16>, vector<16x32xbf16>, vector<64x32xf32> -> vector<64x32xf32>
    %c0_3 = arith.constant 0 : index
    %c0_4 = arith.constant 0 : index
    %3 = vector.load %arg2[%c0_3, %c0_4] : memref<1x32xf32, #tpu.memory_space<vmem>>, vector<1x32xf32>
    %4 = vector.broadcast %3 : vector<1x32xf32> to vector<64x32xf32>
    %5 = arith.addf %2, %4 : vector<64x32xf32>
    %c0_5 = arith.constant 0 : index
    %c0_6 = arith.constant 0 : index
    %6 = vector.load %arg2[%c0_5, %c0_6] : memref<1x32xf32, #tpu.memory_space<vmem>>, vector<1x32xf32>
    %cst_7 = arith.constant dense<0.000000e+00> : vector<32xf32>
    %7 = vector.multi_reduction <add>, %5, %cst_7 [0] : vector<64x32xf32> to vector<32xf32>
    %8 = vector.shape_cast %7 : vector<32xf32> to vector<1x32xf32>
    %9 = arith.mulf %5, %5 : vector<64x32xf32>
    %cst_8 = arith.constant dense<0.000000e+00> : vector<32xf32>
    %10 = vector.multi_reduction <add>, %9, %cst_8 [0] : vector<64x32xf32> to vector<32xf32>
    %11 = vector.shape_cast %10 : vector<32xf32> to vector<1x32xf32>
    %cst_9 = arith.constant 4.800000e+01 : f32
    %12 = vector.broadcast %cst_9 : f32 to vector<1x32xf32>
    %13 = arith.mulf %12, %6 : vector<1x32xf32>
    %14 = arith.subf %8, %13 : vector<1x32xf32>
    %cst_10 = arith.constant 1.600000e+01 : f32
    %15 = vector.broadcast %cst_10 : f32 to vector<1x32xf32>
    %16 = arith.divf %14, %15 : vector<1x32xf32>
    %17 = arith.mulf %6, %6 : vector<1x32xf32>
    %cst_11 = arith.constant 4.800000e+01 : f32
    %18 = vector.broadcast %cst_11 : f32 to vector<1x32xf32>
    %19 = arith.mulf %18, %17 : vector<1x32xf32>
    %20 = arith.subf %11, %19 : vector<1x32xf32>
    %cst_12 = arith.constant 1.600000e+01 : f32
    %21 = vector.broadcast %cst_12 : f32 to vector<1x32xf32>
    %22 = arith.divf %20, %21 : vector<1x32xf32>
    %23 = arith.mulf %16, %16 : vector<1x32xf32>
    %24 = arith.subf %22, %23 : vector<1x32xf32>
    %cst_13 = arith.constant 0.000000e+00 : f32
    %25 = vector.broadcast %cst_13 : f32 to vector<1x32xf32>
    %26 = arith.maximumf %24, %25 : vector<1x32xf32>
    %c0_14 = arith.constant 0 : index
    %c0_15 = arith.constant 0 : index
    %27 = vector.load %arg3[%c0_14, %c0_15] : memref<1x32xf32, #tpu.memory_space<vmem>>, vector<1x32xf32>
    %cst_16 = arith.constant 9.99999974E-6 : f32
    %28 = vector.broadcast %cst_16 : f32 to vector<1x32xf32>
    %29 = arith.addf %26, %28 : vector<1x32xf32>
    %30 = math.rsqrt %29 : vector<1x32xf32>
    %31 = arith.mulf %27, %30 : vector<1x32xf32>
    %c0_17 = arith.constant 0 : index
    %c0_18 = arith.constant 0 : index
    %32 = vector.load %arg4[%c0_17, %c0_18] : memref<1x32xf32, #tpu.memory_space<vmem>>, vector<1x32xf32>
    %33 = arith.mulf %16, %31 : vector<1x32xf32>
    %34 = arith.subf %32, %33 : vector<1x32xf32>
    %35 = vector.broadcast %31 : vector<1x32xf32> to vector<64x32xf32>
    %36 = arith.mulf %5, %35 : vector<64x32xf32>
    %37 = vector.broadcast %34 : vector<1x32xf32> to vector<64x32xf32>
    %38 = arith.addf %36, %37 : vector<64x32xf32>
    %39 = arith.truncf %38 : vector<64x32xf32> to vector<64x32xbf16>
    %c0_19 = arith.constant 0 : index
    %c0_20 = arith.constant 0 : index
    %40 = vector.load %arg5[%c0_19, %c0_20] : memref<32x128xbf16, #tpu.memory_space<vmem>>, vector<32x128xbf16>
    %cst_21 = arith.constant dense<0.000000e+00> : vector<64x128xf32>
    %41 = tpu.matmul %39, %40, %cst_21 {dimension_numbers = #tpu.dot_dimension_numbers<[1], [0], [0], [1], [0, 0, 1, 1], [], []>} : vector<64x32xbf16>, vector<32x128xbf16>, vector<64x128xf32> -> vector<64x128xf32>
    %c0_22 = arith.constant 0 : index
    %c0_23 = arith.constant 0 : index
    %42 = vector.load %arg7[%c0_22, %c0_23] : memref<1x128xf32, #tpu.memory_space<vmem>>, vector<1x128xf32>
    %43 = vector.broadcast %42 : vector<1x128xf32> to vector<64x128xf32>
    %44 = arith.addf %41, %43 : vector<64x128xf32>
    %c0_24 = arith.constant 0 : index
    %c0_25 = arith.constant 0 : index
    %45 = vector.load %arg6[%c0_24, %c0_25] : memref<32x128xbf16, #tpu.memory_space<vmem>>, vector<32x128xbf16>
    %c0_26 = arith.constant 0 : index
    %c0_27 = arith.constant 0 : index
    %46 = vector.load %arg8[%c0_26, %c0_27] : memref<64x128xbf16, #tpu.memory_space<vmem>>, vector<64x128xbf16>
    %c0_28 = arith.constant 0 : index
    %c0_29 = arith.constant 0 : index
    %47 = vector.load %arg10[%c0_28, %c0_29] : memref<64x128xbf16, #tpu.memory_space<vmem>>, vector<64x128xbf16>
    %c0_30 = arith.constant 0 : index
    %c0_31 = arith.constant 0 : index
    %48 = vector.load %arg9[%c0_30, %c0_31] : memref<1x128xf32, #tpu.memory_space<vmem>>, vector<1x128xf32>
    %c0_32 = arith.constant 0 : index
    %c0_33 = arith.constant 0 : index
    %49 = vector.load %arg11[%c0_32, %c0_33] : memref<1x128xf32, #tpu.memory_space<vmem>>, vector<1x128xf32>
    %50 = tpu.iota {dimensions = array<i32: 1>} : vector<1x128xi32>
    %c96_i32 = arith.constant 96 : i32
    %51 = vector.broadcast %c96_i32 : i32 to vector<1x128xi32>
    %52 = arith.cmpi slt, %50, %51 : vector<1x128xi32>
    %cst_34 = arith.constant 5.000000e-01 : f32
    %cst_35 = arith.constant 1.000000e+00 : f32
    %53 = vector.broadcast %cst_34 : f32 to vector<1x128xf32>
    %54 = vector.broadcast %cst_35 : f32 to vector<1x128xf32>
    %55 = arith.select %52, %53, %54 : vector<1x128xi1>, vector<1x128xf32>
    %cst_36 = arith.constant 0.000000e+00 : f32
    %56 = vector.broadcast %cst_36 : f32 to vector<8x32xf32>
    %57 = vector.extract_strided_slice %44 {offsets = [0, 0], sizes = [8, 128], strides = [1, 1]} : vector<64x128xf32> to vector<8x128xf32>
    %58 = vector.broadcast %55 : vector<1x128xf32> to vector<8x128xf32>
    %59 = arith.mulf %57, %58 : vector<8x128xf32>
    %60 = math.tanh %59 : vector<8x128xf32>
    %61 = vector.extract_strided_slice %60 {offsets = [0, 0], sizes = [8, 96], strides = [1, 1]} : vector<8x128xf32> to vector<8x96xf32>
    %cst_37 = arith.constant 5.000000e-01 : f32
    %62 = vector.broadcast %cst_37 : f32 to vector<8x96xf32>
    %63 = arith.mulf %62, %61 : vector<8x96xf32>
    %cst_38 = arith.constant 5.000000e-01 : f32
    %64 = vector.broadcast %cst_38 : f32 to vector<8x96xf32>
    %65 = arith.addf %63, %64 : vector<8x96xf32>
    %66 = vector.extract_strided_slice %60 {offsets = [0, 96], sizes = [8, 32], strides = [1, 1]} : vector<8x128xf32> to vector<8x32xf32>
    %67 = vector.extract_strided_slice %65 {offsets = [0, 0], sizes = [8, 32], strides = [1, 1]} : vector<8x96xf32> to vector<8x32xf32>
    %68 = vector.extract_strided_slice %65 {offsets = [0, 32], sizes = [8, 32], strides = [1, 1]} : vector<8x96xf32> to vector<8x32xf32>
    %69 = vector.extract_strided_slice %65 {offsets = [0, 64], sizes = [8, 32], strides = [1, 1]} : vector<8x96xf32> to vector<8x32xf32>
    %70 = arith.mulf %68, %56 : vector<8x32xf32>
    %71 = arith.mulf %67, %66 : vector<8x32xf32>
    %72 = arith.addf %70, %71 : vector<8x32xf32>
    %73 = math.tanh %72 : vector<8x32xf32>
    %74 = arith.mulf %69, %73 : vector<8x32xf32>
    %75 = vector.extract_strided_slice %44 {offsets = [8, 0], sizes = [8, 128], strides = [1, 1]} : vector<64x128xf32> to vector<8x128xf32>
    %76 = arith.truncf %74 : vector<8x32xf32> to vector<8x32xbf16>
    %cst_39 = arith.constant dense<0.000000e+00> : vector<8x128xf32>
    %77 = tpu.matmul %76, %45, %cst_39 {dimension_numbers = #tpu.dot_dimension_numbers<[1], [0], [0], [1], [0, 0, 1, 1], [], []>} : vector<8x32xbf16>, vector<32x128xbf16>, vector<8x128xf32> -> vector<8x128xf32>
    %78 = arith.addf %75, %77 : vector<8x128xf32>
    %79 = vector.broadcast %55 : vector<1x128xf32> to vector<8x128xf32>
    %80 = arith.mulf %78, %79 : vector<8x128xf32>
    %81 = math.tanh %80 : vector<8x128xf32>
    %82 = vector.extract_strided_slice %81 {offsets = [0, 0], sizes = [8, 96], strides = [1, 1]} : vector<8x128xf32> to vector<8x96xf32>
    %cst_40 = arith.constant 5.000000e-01 : f32
    %83 = vector.broadcast %cst_40 : f32 to vector<8x96xf32>
    %84 = arith.mulf %83, %82 : vector<8x96xf32>
    %cst_41 = arith.constant 5.000000e-01 : f32
    %85 = vector.broadcast %cst_41 : f32 to vector<8x96xf32>
    %86 = arith.addf %84, %85 : vector<8x96xf32>
    %87 = vector.extract_strided_slice %81 {offsets = [0, 96], sizes = [8, 32], strides = [1, 1]} : vector<8x128xf32> to vector<8x32xf32>
    %88 = vector.extract_strided_slice %86 {offsets = [0, 0], sizes = [8, 32], strides = [1, 1]} : vector<8x96xf32> to vector<8x32xf32>
    %89 = vector.extract_strided_slice %86 {offsets = [0, 32], sizes = [8, 32], strides = [1, 1]} : vector<8x96xf32> to vector<8x32xf32>
    %90 = vector.extract_strided_slice %86 {offsets = [0, 64], sizes = [8, 32], strides = [1, 1]} : vector<8x96xf32> to vector<8x32xf32>
    %91 = arith.mulf %89, %72 : vector<8x32xf32>
    %92 = arith.mulf %88, %87 : vector<8x32xf32>
    %93 = arith.addf %91, %92 : vector<8x32xf32>
    %94 = math.tanh %93 : vector<8x32xf32>
    %95 = arith.mulf %90, %94 : vector<8x32xf32>
    %96 = tpu.concatenate %74, %56 in 1 : vector<8x32xf32>, vector<8x32xf32> -> vector<8x64xf32>
    %97 = arith.truncf %96 : vector<8x64xf32> to vector<8x64xbf16>
    %cst_42 = arith.constant dense<0.000000e+00> : vector<8x128xf32>
    %98 = tpu.matmul %97, %46, %cst_42 {dimension_numbers = #tpu.dot_dimension_numbers<[1], [0], [0], [1], [0, 0, 1, 1], [], []>} : vector<8x64xbf16>, vector<64x128xbf16>, vector<8x128xf32> -> vector<8x128xf32>
    %99 = vector.broadcast %48 : vector<1x128xf32> to vector<8x128xf32>
    %100 = arith.addf %98, %99 : vector<8x128xf32>
    %101 = vector.broadcast %55 : vector<1x128xf32> to vector<8x128xf32>
    %102 = arith.mulf %100, %101 : vector<8x128xf32>
    %103 = math.tanh %102 : vector<8x128xf32>
    %104 = vector.extract_strided_slice %103 {offsets = [0, 0], sizes = [8, 96], strides = [1, 1]} : vector<8x128xf32> to vector<8x96xf32>
    %cst_43 = arith.constant 5.000000e-01 : f32
    %105 = vector.broadcast %cst_43 : f32 to vector<8x96xf32>
    %106 = arith.mulf %105, %104 : vector<8x96xf32>
    %cst_44 = arith.constant 5.000000e-01 : f32
    %107 = vector.broadcast %cst_44 : f32 to vector<8x96xf32>
    %108 = arith.addf %106, %107 : vector<8x96xf32>
    %109 = vector.extract_strided_slice %103 {offsets = [0, 96], sizes = [8, 32], strides = [1, 1]} : vector<8x128xf32> to vector<8x32xf32>
    %110 = vector.extract_strided_slice %108 {offsets = [0, 0], sizes = [8, 32], strides = [1, 1]} : vector<8x96xf32> to vector<8x32xf32>
    %111 = vector.extract_strided_slice %108 {offsets = [0, 32], sizes = [8, 32], strides = [1, 1]} : vector<8x96xf32> to vector<8x32xf32>
    %112 = vector.extract_strided_slice %108 {offsets = [0, 64], sizes = [8, 32], strides = [1, 1]} : vector<8x96xf32> to vector<8x32xf32>
    %113 = arith.mulf %111, %56 : vector<8x32xf32>
    %114 = arith.mulf %110, %109 : vector<8x32xf32>
    %115 = arith.addf %113, %114 : vector<8x32xf32>
    %116 = math.tanh %115 : vector<8x32xf32>
    %117 = arith.mulf %112, %116 : vector<8x32xf32>
    %118 = vector.extract_strided_slice %44 {offsets = [16, 0], sizes = [8, 128], strides = [1, 1]} : vector<64x128xf32> to vector<8x128xf32>
    %119 = arith.truncf %95 : vector<8x32xf32> to vector<8x32xbf16>
    %cst_45 = arith.constant dense<0.000000e+00> : vector<8x128xf32>
    %120 = tpu.matmul %119, %45, %cst_45 {dimension_numbers = #tpu.dot_dimension_numbers<[1], [0], [0], [1], [0, 0, 1, 1], [], []>} : vector<8x32xbf16>, vector<32x128xbf16>, vector<8x128xf32> -> vector<8x128xf32>
    %121 = arith.addf %118, %120 : vector<8x128xf32>
    %122 = vector.broadcast %55 : vector<1x128xf32> to vector<8x128xf32>
    %123 = arith.mulf %121, %122 : vector<8x128xf32>
    %124 = math.tanh %123 : vector<8x128xf32>
    %125 = vector.extract_strided_slice %124 {offsets = [0, 0], sizes = [8, 96], strides = [1, 1]} : vector<8x128xf32> to vector<8x96xf32>
    %cst_46 = arith.constant 5.000000e-01 : f32
    %126 = vector.broadcast %cst_46 : f32 to vector<8x96xf32>
    %127 = arith.mulf %126, %125 : vector<8x96xf32>
    %cst_47 = arith.constant 5.000000e-01 : f32
    %128 = vector.broadcast %cst_47 : f32 to vector<8x96xf32>
    %129 = arith.addf %127, %128 : vector<8x96xf32>
    %130 = vector.extract_strided_slice %124 {offsets = [0, 96], sizes = [8, 32], strides = [1, 1]} : vector<8x128xf32> to vector<8x32xf32>
    %131 = vector.extract_strided_slice %129 {offsets = [0, 0], sizes = [8, 32], strides = [1, 1]} : vector<8x96xf32> to vector<8x32xf32>
    %132 = vector.extract_strided_slice %129 {offsets = [0, 32], sizes = [8, 32], strides = [1, 1]} : vector<8x96xf32> to vector<8x32xf32>
    %133 = vector.extract_strided_slice %129 {offsets = [0, 64], sizes = [8, 32], strides = [1, 1]} : vector<8x96xf32> to vector<8x32xf32>
    %134 = arith.mulf %132, %93 : vector<8x32xf32>
    %135 = arith.mulf %131, %130 : vector<8x32xf32>
    %136 = arith.addf %134, %135 : vector<8x32xf32>
    %137 = math.tanh %136 : vector<8x32xf32>
    %138 = arith.mulf %133, %137 : vector<8x32xf32>
    %139 = tpu.concatenate %95, %117 in 1 : vector<8x32xf32>, vector<8x32xf32> -> vector<8x64xf32>
    %140 = arith.truncf %139 : vector<8x64xf32> to vector<8x64xbf16>
    %cst_48 = arith.constant dense<0.000000e+00> : vector<8x128xf32>
    %141 = tpu.matmul %140, %46, %cst_48 {dimension_numbers = #tpu.dot_dimension_numbers<[1], [0], [0], [1], [0, 0, 1, 1], [], []>} : vector<8x64xbf16>, vector<64x128xbf16>, vector<8x128xf32> -> vector<8x128xf32>
    %142 = vector.broadcast %48 : vector<1x128xf32> to vector<8x128xf32>
    %143 = arith.addf %141, %142 : vector<8x128xf32>
    %144 = vector.broadcast %55 : vector<1x128xf32> to vector<8x128xf32>
    %145 = arith.mulf %143, %144 : vector<8x128xf32>
    %146 = math.tanh %145 : vector<8x128xf32>
    %147 = vector.extract_strided_slice %146 {offsets = [0, 0], sizes = [8, 96], strides = [1, 1]} : vector<8x128xf32> to vector<8x96xf32>
    %cst_49 = arith.constant 5.000000e-01 : f32
    %148 = vector.broadcast %cst_49 : f32 to vector<8x96xf32>
    %149 = arith.mulf %148, %147 : vector<8x96xf32>
    %cst_50 = arith.constant 5.000000e-01 : f32
    %150 = vector.broadcast %cst_50 : f32 to vector<8x96xf32>
    %151 = arith.addf %149, %150 : vector<8x96xf32>
    %152 = vector.extract_strided_slice %146 {offsets = [0, 96], sizes = [8, 32], strides = [1, 1]} : vector<8x128xf32> to vector<8x32xf32>
    %153 = vector.extract_strided_slice %151 {offsets = [0, 0], sizes = [8, 32], strides = [1, 1]} : vector<8x96xf32> to vector<8x32xf32>
    %154 = vector.extract_strided_slice %151 {offsets = [0, 32], sizes = [8, 32], strides = [1, 1]} : vector<8x96xf32> to vector<8x32xf32>
    %155 = vector.extract_strided_slice %151 {offsets = [0, 64], sizes = [8, 32], strides = [1, 1]} : vector<8x96xf32> to vector<8x32xf32>
    %156 = arith.mulf %154, %115 : vector<8x32xf32>
    %157 = arith.mulf %153, %152 : vector<8x32xf32>
    %158 = arith.addf %156, %157 : vector<8x32xf32>
    %159 = math.tanh %158 : vector<8x32xf32>
    %160 = arith.mulf %155, %159 : vector<8x32xf32>
    %161 = tpu.concatenate %117, %56 in 1 : vector<8x32xf32>, vector<8x32xf32> -> vector<8x64xf32>
    %162 = arith.truncf %161 : vector<8x64xf32> to vector<8x64xbf16>
    %cst_51 = arith.constant dense<0.000000e+00> : vector<8x128xf32>
    %163 = tpu.matmul %162, %47, %cst_51 {dimension_numbers = #tpu.dot_dimension_numbers<[1], [0], [0], [1], [0, 0, 1, 1], [], []>} : vector<8x64xbf16>, vector<64x128xbf16>, vector<8x128xf32> -> vector<8x128xf32>
    %164 = vector.broadcast %49 : vector<1x128xf32> to vector<8x128xf32>
    %165 = arith.addf %163, %164 : vector<8x128xf32>
    %166 = vector.broadcast %55 : vector<1x128xf32> to vector<8x128xf32>
    %167 = arith.mulf %165, %166 : vector<8x128xf32>
    %168 = math.tanh %167 : vector<8x128xf32>
    %169 = vector.extract_strided_slice %168 {offsets = [0, 0], sizes = [8, 96], strides = [1, 1]} : vector<8x128xf32> to vector<8x96xf32>
    %cst_52 = arith.constant 5.000000e-01 : f32
    %170 = vector.broadcast %cst_52 : f32 to vector<8x96xf32>
    %171 = arith.mulf %170, %169 : vector<8x96xf32>
    %cst_53 = arith.constant 5.000000e-01 : f32
    %172 = vector.broadcast %cst_53 : f32 to vector<8x96xf32>
    %173 = arith.addf %171, %172 : vector<8x96xf32>
    %174 = vector.extract_strided_slice %168 {offsets = [0, 96], sizes = [8, 32], strides = [1, 1]} : vector<8x128xf32> to vector<8x32xf32>
    %175 = vector.extract_strided_slice %173 {offsets = [0, 0], sizes = [8, 32], strides = [1, 1]} : vector<8x96xf32> to vector<8x32xf32>
    %176 = vector.extract_strided_slice %173 {offsets = [0, 32], sizes = [8, 32], strides = [1, 1]} : vector<8x96xf32> to vector<8x32xf32>
    %177 = vector.extract_strided_slice %173 {offsets = [0, 64], sizes = [8, 32], strides = [1, 1]} : vector<8x96xf32> to vector<8x32xf32>
    %178 = arith.mulf %176, %56 : vector<8x32xf32>
    %179 = arith.mulf %175, %174 : vector<8x32xf32>
    %180 = arith.addf %178, %179 : vector<8x32xf32>
    %181 = math.tanh %180 : vector<8x32xf32>
    %182 = arith.mulf %177, %181 : vector<8x32xf32>
    %183 = vector.extract_strided_slice %44 {offsets = [24, 0], sizes = [8, 128], strides = [1, 1]} : vector<64x128xf32> to vector<8x128xf32>
    %184 = arith.truncf %138 : vector<8x32xf32> to vector<8x32xbf16>
    %cst_54 = arith.constant dense<0.000000e+00> : vector<8x128xf32>
    %185 = tpu.matmul %184, %45, %cst_54 {dimension_numbers = #tpu.dot_dimension_numbers<[1], [0], [0], [1], [0, 0, 1, 1], [], []>} : vector<8x32xbf16>, vector<32x128xbf16>, vector<8x128xf32> -> vector<8x128xf32>
    %186 = arith.addf %183, %185 : vector<8x128xf32>
    %187 = vector.broadcast %55 : vector<1x128xf32> to vector<8x128xf32>
    %188 = arith.mulf %186, %187 : vector<8x128xf32>
    %189 = math.tanh %188 : vector<8x128xf32>
    %190 = vector.extract_strided_slice %189 {offsets = [0, 0], sizes = [8, 96], strides = [1, 1]} : vector<8x128xf32> to vector<8x96xf32>
    %cst_55 = arith.constant 5.000000e-01 : f32
    %191 = vector.broadcast %cst_55 : f32 to vector<8x96xf32>
    %192 = arith.mulf %191, %190 : vector<8x96xf32>
    %cst_56 = arith.constant 5.000000e-01 : f32
    %193 = vector.broadcast %cst_56 : f32 to vector<8x96xf32>
    %194 = arith.addf %192, %193 : vector<8x96xf32>
    %195 = vector.extract_strided_slice %189 {offsets = [0, 96], sizes = [8, 32], strides = [1, 1]} : vector<8x128xf32> to vector<8x32xf32>
    %196 = vector.extract_strided_slice %194 {offsets = [0, 0], sizes = [8, 32], strides = [1, 1]} : vector<8x96xf32> to vector<8x32xf32>
    %197 = vector.extract_strided_slice %194 {offsets = [0, 32], sizes = [8, 32], strides = [1, 1]} : vector<8x96xf32> to vector<8x32xf32>
    %198 = vector.extract_strided_slice %194 {offsets = [0, 64], sizes = [8, 32], strides = [1, 1]} : vector<8x96xf32> to vector<8x32xf32>
    %199 = arith.mulf %197, %136 : vector<8x32xf32>
    %200 = arith.mulf %196, %195 : vector<8x32xf32>
    %201 = arith.addf %199, %200 : vector<8x32xf32>
    %202 = math.tanh %201 : vector<8x32xf32>
    %203 = arith.mulf %198, %202 : vector<8x32xf32>
    %204 = tpu.concatenate %138, %160 in 1 : vector<8x32xf32>, vector<8x32xf32> -> vector<8x64xf32>
    %205 = arith.truncf %204 : vector<8x64xf32> to vector<8x64xbf16>
    %cst_57 = arith.constant dense<0.000000e+00> : vector<8x128xf32>
    %206 = tpu.matmul %205, %46, %cst_57 {dimension_numbers = #tpu.dot_dimension_numbers<[1], [0], [0], [1], [0, 0, 1, 1], [], []>} : vector<8x64xbf16>, vector<64x128xbf16>, vector<8x128xf32> -> vector<8x128xf32>
    %207 = vector.broadcast %48 : vector<1x128xf32> to vector<8x128xf32>
    %208 = arith.addf %206, %207 : vector<8x128xf32>
    %209 = vector.broadcast %55 : vector<1x128xf32> to vector<8x128xf32>
    %210 = arith.mulf %208, %209 : vector<8x128xf32>
    %211 = math.tanh %210 : vector<8x128xf32>
    %212 = vector.extract_strided_slice %211 {offsets = [0, 0], sizes = [8, 96], strides = [1, 1]} : vector<8x128xf32> to vector<8x96xf32>
    %cst_58 = arith.constant 5.000000e-01 : f32
    %213 = vector.broadcast %cst_58 : f32 to vector<8x96xf32>
    %214 = arith.mulf %213, %212 : vector<8x96xf32>
    %cst_59 = arith.constant 5.000000e-01 : f32
    %215 = vector.broadcast %cst_59 : f32 to vector<8x96xf32>
    %216 = arith.addf %214, %215 : vector<8x96xf32>
    %217 = vector.extract_strided_slice %211 {offsets = [0, 96], sizes = [8, 32], strides = [1, 1]} : vector<8x128xf32> to vector<8x32xf32>
    %218 = vector.extract_strided_slice %216 {offsets = [0, 0], sizes = [8, 32], strides = [1, 1]} : vector<8x96xf32> to vector<8x32xf32>
    %219 = vector.extract_strided_slice %216 {offsets = [0, 32], sizes = [8, 32], strides = [1, 1]} : vector<8x96xf32> to vector<8x32xf32>
    %220 = vector.extract_strided_slice %216 {offsets = [0, 64], sizes = [8, 32], strides = [1, 1]} : vector<8x96xf32> to vector<8x32xf32>
    %221 = arith.mulf %219, %158 : vector<8x32xf32>
    %222 = arith.mulf %218, %217 : vector<8x32xf32>
    %223 = arith.addf %221, %222 : vector<8x32xf32>
    %224 = math.tanh %223 : vector<8x32xf32>
    %225 = arith.mulf %220, %224 : vector<8x32xf32>
    %226 = tpu.concatenate %160, %182 in 1 : vector<8x32xf32>, vector<8x32xf32> -> vector<8x64xf32>
    %227 = arith.truncf %226 : vector<8x64xf32> to vector<8x64xbf16>
    %cst_60 = arith.constant dense<0.000000e+00> : vector<8x128xf32>
    %228 = tpu.matmul %227, %47, %cst_60 {dimension_numbers = #tpu.dot_dimension_numbers<[1], [0], [0], [1], [0, 0, 1, 1], [], []>} : vector<8x64xbf16>, vector<64x128xbf16>, vector<8x128xf32> -> vector<8x128xf32>
    %229 = vector.broadcast %49 : vector<1x128xf32> to vector<8x128xf32>
    %230 = arith.addf %228, %229 : vector<8x128xf32>
    %231 = vector.broadcast %55 : vector<1x128xf32> to vector<8x128xf32>
    %232 = arith.mulf %230, %231 : vector<8x128xf32>
    %233 = math.tanh %232 : vector<8x128xf32>
    %234 = vector.extract_strided_slice %233 {offsets = [0, 0], sizes = [8, 96], strides = [1, 1]} : vector<8x128xf32> to vector<8x96xf32>
    %cst_61 = arith.constant 5.000000e-01 : f32
    %235 = vector.broadcast %cst_61 : f32 to vector<8x96xf32>
    %236 = arith.mulf %235, %234 : vector<8x96xf32>
    %cst_62 = arith.constant 5.000000e-01 : f32
    %237 = vector.broadcast %cst_62 : f32 to vector<8x96xf32>
    %238 = arith.addf %236, %237 : vector<8x96xf32>
    %239 = vector.extract_strided_slice %233 {offsets = [0, 96], sizes = [8, 32], strides = [1, 1]} : vector<8x128xf32> to vector<8x32xf32>
    %240 = vector.extract_strided_slice %238 {offsets = [0, 0], sizes = [8, 32], strides = [1, 1]} : vector<8x96xf32> to vector<8x32xf32>
    %241 = vector.extract_strided_slice %238 {offsets = [0, 32], sizes = [8, 32], strides = [1, 1]} : vector<8x96xf32> to vector<8x32xf32>
    %242 = vector.extract_strided_slice %238 {offsets = [0, 64], sizes = [8, 32], strides = [1, 1]} : vector<8x96xf32> to vector<8x32xf32>
    %243 = arith.mulf %241, %180 : vector<8x32xf32>
    %244 = arith.mulf %240, %239 : vector<8x32xf32>
    %245 = arith.addf %243, %244 : vector<8x32xf32>
    %246 = math.tanh %245 : vector<8x32xf32>
    %247 = arith.mulf %242, %246 : vector<8x32xf32>
    %248 = arith.maximumf %182, %247 : vector<8x32xf32>
    %249 = vector.extract_strided_slice %44 {offsets = [32, 0], sizes = [8, 128], strides = [1, 1]} : vector<64x128xf32> to vector<8x128xf32>
    %250 = arith.truncf %203 : vector<8x32xf32> to vector<8x32xbf16>
    %cst_63 = arith.constant dense<0.000000e+00> : vector<8x128xf32>
    %251 = tpu.matmul %250, %45, %cst_63 {dimension_numbers = #tpu.dot_dimension_numbers<[1], [0], [0], [1], [0, 0, 1, 1], [], []>} : vector<8x32xbf16>, vector<32x128xbf16>, vector<8x128xf32> -> vector<8x128xf32>
    %252 = arith.addf %249, %251 : vector<8x128xf32>
    %253 = vector.broadcast %55 : vector<1x128xf32> to vector<8x128xf32>
    %254 = arith.mulf %252, %253 : vector<8x128xf32>
    %255 = math.tanh %254 : vector<8x128xf32>
    %256 = vector.extract_strided_slice %255 {offsets = [0, 0], sizes = [8, 96], strides = [1, 1]} : vector<8x128xf32> to vector<8x96xf32>
    %cst_64 = arith.constant 5.000000e-01 : f32
    %257 = vector.broadcast %cst_64 : f32 to vector<8x96xf32>
    %258 = arith.mulf %257, %256 : vector<8x96xf32>
    %cst_65 = arith.constant 5.000000e-01 : f32
    %259 = vector.broadcast %cst_65 : f32 to vector<8x96xf32>
    %260 = arith.addf %258, %259 : vector<8x96xf32>
    %261 = vector.extract_strided_slice %255 {offsets = [0, 96], sizes = [8, 32], strides = [1, 1]} : vector<8x128xf32> to vector<8x32xf32>
    %262 = vector.extract_strided_slice %260 {offsets = [0, 0], sizes = [8, 32], strides = [1, 1]} : vector<8x96xf32> to vector<8x32xf32>
    %263 = vector.extract_strided_slice %260 {offsets = [0, 32], sizes = [8, 32], strides = [1, 1]} : vector<8x96xf32> to vector<8x32xf32>
    %264 = vector.extract_strided_slice %260 {offsets = [0, 64], sizes = [8, 32], strides = [1, 1]} : vector<8x96xf32> to vector<8x32xf32>
    %265 = arith.mulf %263, %201 : vector<8x32xf32>
    %266 = arith.mulf %262, %261 : vector<8x32xf32>
    %267 = arith.addf %265, %266 : vector<8x32xf32>
    %268 = math.tanh %267 : vector<8x32xf32>
    %269 = arith.mulf %264, %268 : vector<8x32xf32>
    %270 = tpu.concatenate %203, %225 in 1 : vector<8x32xf32>, vector<8x32xf32> -> vector<8x64xf32>
    %271 = arith.truncf %270 : vector<8x64xf32> to vector<8x64xbf16>
    %cst_66 = arith.constant dense<0.000000e+00> : vector<8x128xf32>
    %272 = tpu.matmul %271, %46, %cst_66 {dimension_numbers = #tpu.dot_dimension_numbers<[1], [0], [0], [1], [0, 0, 1, 1], [], []>} : vector<8x64xbf16>, vector<64x128xbf16>, vector<8x128xf32> -> vector<8x128xf32>
    %273 = vector.broadcast %48 : vector<1x128xf32> to vector<8x128xf32>
    %274 = arith.addf %272, %273 : vector<8x128xf32>
    %275 = vector.broadcast %55 : vector<1x128xf32> to vector<8x128xf32>
    %276 = arith.mulf %274, %275 : vector<8x128xf32>
    %277 = math.tanh %276 : vector<8x128xf32>
    %278 = vector.extract_strided_slice %277 {offsets = [0, 0], sizes = [8, 96], strides = [1, 1]} : vector<8x128xf32> to vector<8x96xf32>
    %cst_67 = arith.constant 5.000000e-01 : f32
    %279 = vector.broadcast %cst_67 : f32 to vector<8x96xf32>
    %280 = arith.mulf %279, %278 : vector<8x96xf32>
    %cst_68 = arith.constant 5.000000e-01 : f32
    %281 = vector.broadcast %cst_68 : f32 to vector<8x96xf32>
    %282 = arith.addf %280, %281 : vector<8x96xf32>
    %283 = vector.extract_strided_slice %277 {offsets = [0, 96], sizes = [8, 32], strides = [1, 1]} : vector<8x128xf32> to vector<8x32xf32>
    %284 = vector.extract_strided_slice %282 {offsets = [0, 0], sizes = [8, 32], strides = [1, 1]} : vector<8x96xf32> to vector<8x32xf32>
    %285 = vector.extract_strided_slice %282 {offsets = [0, 32], sizes = [8, 32], strides = [1, 1]} : vector<8x96xf32> to vector<8x32xf32>
    %286 = vector.extract_strided_slice %282 {offsets = [0, 64], sizes = [8, 32], strides = [1, 1]} : vector<8x96xf32> to vector<8x32xf32>
    %287 = arith.mulf %285, %223 : vector<8x32xf32>
    %288 = arith.mulf %284, %283 : vector<8x32xf32>
    %289 = arith.addf %287, %288 : vector<8x32xf32>
    %290 = math.tanh %289 : vector<8x32xf32>
    %291 = arith.mulf %286, %290 : vector<8x32xf32>
    %292 = tpu.concatenate %225, %247 in 1 : vector<8x32xf32>, vector<8x32xf32> -> vector<8x64xf32>
    %293 = arith.truncf %292 : vector<8x64xf32> to vector<8x64xbf16>
    %cst_69 = arith.constant dense<0.000000e+00> : vector<8x128xf32>
    %294 = tpu.matmul %293, %47, %cst_69 {dimension_numbers = #tpu.dot_dimension_numbers<[1], [0], [0], [1], [0, 0, 1, 1], [], []>} : vector<8x64xbf16>, vector<64x128xbf16>, vector<8x128xf32> -> vector<8x128xf32>
    %295 = vector.broadcast %49 : vector<1x128xf32> to vector<8x128xf32>
    %296 = arith.addf %294, %295 : vector<8x128xf32>
    %297 = vector.broadcast %55 : vector<1x128xf32> to vector<8x128xf32>
    %298 = arith.mulf %296, %297 : vector<8x128xf32>
    %299 = math.tanh %298 : vector<8x128xf32>
    %300 = vector.extract_strided_slice %299 {offsets = [0, 0], sizes = [8, 96], strides = [1, 1]} : vector<8x128xf32> to vector<8x96xf32>
    %cst_70 = arith.constant 5.000000e-01 : f32
    %301 = vector.broadcast %cst_70 : f32 to vector<8x96xf32>
    %302 = arith.mulf %301, %300 : vector<8x96xf32>
    %cst_71 = arith.constant 5.000000e-01 : f32
    %303 = vector.broadcast %cst_71 : f32 to vector<8x96xf32>
    %304 = arith.addf %302, %303 : vector<8x96xf32>
    %305 = vector.extract_strided_slice %299 {offsets = [0, 96], sizes = [8, 32], strides = [1, 1]} : vector<8x128xf32> to vector<8x32xf32>
    %306 = vector.extract_strided_slice %304 {offsets = [0, 0], sizes = [8, 32], strides = [1, 1]} : vector<8x96xf32> to vector<8x32xf32>
    %307 = vector.extract_strided_slice %304 {offsets = [0, 32], sizes = [8, 32], strides = [1, 1]} : vector<8x96xf32> to vector<8x32xf32>
    %308 = vector.extract_strided_slice %304 {offsets = [0, 64], sizes = [8, 32], strides = [1, 1]} : vector<8x96xf32> to vector<8x32xf32>
    %309 = arith.mulf %307, %245 : vector<8x32xf32>
    %310 = arith.mulf %306, %305 : vector<8x32xf32>
    %311 = arith.addf %309, %310 : vector<8x32xf32>
    %312 = math.tanh %311 : vector<8x32xf32>
    %313 = arith.mulf %308, %312 : vector<8x32xf32>
    %314 = arith.maximumf %248, %313 : vector<8x32xf32>
    %315 = vector.extract_strided_slice %44 {offsets = [40, 0], sizes = [8, 128], strides = [1, 1]} : vector<64x128xf32> to vector<8x128xf32>
    %316 = arith.truncf %269 : vector<8x32xf32> to vector<8x32xbf16>
    %cst_72 = arith.constant dense<0.000000e+00> : vector<8x128xf32>
    %317 = tpu.matmul %316, %45, %cst_72 {dimension_numbers = #tpu.dot_dimension_numbers<[1], [0], [0], [1], [0, 0, 1, 1], [], []>} : vector<8x32xbf16>, vector<32x128xbf16>, vector<8x128xf32> -> vector<8x128xf32>
    %318 = arith.addf %315, %317 : vector<8x128xf32>
    %319 = vector.broadcast %55 : vector<1x128xf32> to vector<8x128xf32>
    %320 = arith.mulf %318, %319 : vector<8x128xf32>
    %321 = math.tanh %320 : vector<8x128xf32>
    %322 = vector.extract_strided_slice %321 {offsets = [0, 0], sizes = [8, 96], strides = [1, 1]} : vector<8x128xf32> to vector<8x96xf32>
    %cst_73 = arith.constant 5.000000e-01 : f32
    %323 = vector.broadcast %cst_73 : f32 to vector<8x96xf32>
    %324 = arith.mulf %323, %322 : vector<8x96xf32>
    %cst_74 = arith.constant 5.000000e-01 : f32
    %325 = vector.broadcast %cst_74 : f32 to vector<8x96xf32>
    %326 = arith.addf %324, %325 : vector<8x96xf32>
    %327 = vector.extract_strided_slice %321 {offsets = [0, 96], sizes = [8, 32], strides = [1, 1]} : vector<8x128xf32> to vector<8x32xf32>
    %328 = vector.extract_strided_slice %326 {offsets = [0, 0], sizes = [8, 32], strides = [1, 1]} : vector<8x96xf32> to vector<8x32xf32>
    %329 = vector.extract_strided_slice %326 {offsets = [0, 32], sizes = [8, 32], strides = [1, 1]} : vector<8x96xf32> to vector<8x32xf32>
    %330 = vector.extract_strided_slice %326 {offsets = [0, 64], sizes = [8, 32], strides = [1, 1]} : vector<8x96xf32> to vector<8x32xf32>
    %331 = arith.mulf %329, %267 : vector<8x32xf32>
    %332 = arith.mulf %328, %327 : vector<8x32xf32>
    %333 = arith.addf %331, %332 : vector<8x32xf32>
    %334 = math.tanh %333 : vector<8x32xf32>
    %335 = arith.mulf %330, %334 : vector<8x32xf32>
    %336 = tpu.concatenate %269, %291 in 1 : vector<8x32xf32>, vector<8x32xf32> -> vector<8x64xf32>
    %337 = arith.truncf %336 : vector<8x64xf32> to vector<8x64xbf16>
    %cst_75 = arith.constant dense<0.000000e+00> : vector<8x128xf32>
    %338 = tpu.matmul %337, %46, %cst_75 {dimension_numbers = #tpu.dot_dimension_numbers<[1], [0], [0], [1], [0, 0, 1, 1], [], []>} : vector<8x64xbf16>, vector<64x128xbf16>, vector<8x128xf32> -> vector<8x128xf32>
    %339 = vector.broadcast %48 : vector<1x128xf32> to vector<8x128xf32>
    %340 = arith.addf %338, %339 : vector<8x128xf32>
    %341 = vector.broadcast %55 : vector<1x128xf32> to vector<8x128xf32>
    %342 = arith.mulf %340, %341 : vector<8x128xf32>
    %343 = math.tanh %342 : vector<8x128xf32>
    %344 = vector.extract_strided_slice %343 {offsets = [0, 0], sizes = [8, 96], strides = [1, 1]} : vector<8x128xf32> to vector<8x96xf32>
    %cst_76 = arith.constant 5.000000e-01 : f32
    %345 = vector.broadcast %cst_76 : f32 to vector<8x96xf32>
    %346 = arith.mulf %345, %344 : vector<8x96xf32>
    %cst_77 = arith.constant 5.000000e-01 : f32
    %347 = vector.broadcast %cst_77 : f32 to vector<8x96xf32>
    %348 = arith.addf %346, %347 : vector<8x96xf32>
    %349 = vector.extract_strided_slice %343 {offsets = [0, 96], sizes = [8, 32], strides = [1, 1]} : vector<8x128xf32> to vector<8x32xf32>
    %350 = vector.extract_strided_slice %348 {offsets = [0, 0], sizes = [8, 32], strides = [1, 1]} : vector<8x96xf32> to vector<8x32xf32>
    %351 = vector.extract_strided_slice %348 {offsets = [0, 32], sizes = [8, 32], strides = [1, 1]} : vector<8x96xf32> to vector<8x32xf32>
    %352 = vector.extract_strided_slice %348 {offsets = [0, 64], sizes = [8, 32], strides = [1, 1]} : vector<8x96xf32> to vector<8x32xf32>
    %353 = arith.mulf %351, %289 : vector<8x32xf32>
    %354 = arith.mulf %350, %349 : vector<8x32xf32>
    %355 = arith.addf %353, %354 : vector<8x32xf32>
    %356 = math.tanh %355 : vector<8x32xf32>
    %357 = arith.mulf %352, %356 : vector<8x32xf32>
    %358 = tpu.concatenate %291, %313 in 1 : vector<8x32xf32>, vector<8x32xf32> -> vector<8x64xf32>
    %359 = arith.truncf %358 : vector<8x64xf32> to vector<8x64xbf16>
    %cst_78 = arith.constant dense<0.000000e+00> : vector<8x128xf32>
    %360 = tpu.matmul %359, %47, %cst_78 {dimension_numbers = #tpu.dot_dimension_numbers<[1], [0], [0], [1], [0, 0, 1, 1], [], []>} : vector<8x64xbf16>, vector<64x128xbf16>, vector<8x128xf32> -> vector<8x128xf32>
    %361 = vector.broadcast %49 : vector<1x128xf32> to vector<8x128xf32>
    %362 = arith.addf %360, %361 : vector<8x128xf32>
    %363 = vector.broadcast %55 : vector<1x128xf32> to vector<8x128xf32>
    %364 = arith.mulf %362, %363 : vector<8x128xf32>
    %365 = math.tanh %364 : vector<8x128xf32>
    %366 = vector.extract_strided_slice %365 {offsets = [0, 0], sizes = [8, 96], strides = [1, 1]} : vector<8x128xf32> to vector<8x96xf32>
    %cst_79 = arith.constant 5.000000e-01 : f32
    %367 = vector.broadcast %cst_79 : f32 to vector<8x96xf32>
    %368 = arith.mulf %367, %366 : vector<8x96xf32>
    %cst_80 = arith.constant 5.000000e-01 : f32
    %369 = vector.broadcast %cst_80 : f32 to vector<8x96xf32>
    %370 = arith.addf %368, %369 : vector<8x96xf32>
    %371 = vector.extract_strided_slice %365 {offsets = [0, 96], sizes = [8, 32], strides = [1, 1]} : vector<8x128xf32> to vector<8x32xf32>
    %372 = vector.extract_strided_slice %370 {offsets = [0, 0], sizes = [8, 32], strides = [1, 1]} : vector<8x96xf32> to vector<8x32xf32>
    %373 = vector.extract_strided_slice %370 {offsets = [0, 32], sizes = [8, 32], strides = [1, 1]} : vector<8x96xf32> to vector<8x32xf32>
    %374 = vector.extract_strided_slice %370 {offsets = [0, 64], sizes = [8, 32], strides = [1, 1]} : vector<8x96xf32> to vector<8x32xf32>
    %375 = arith.mulf %373, %311 : vector<8x32xf32>
    %376 = arith.mulf %372, %371 : vector<8x32xf32>
    %377 = arith.addf %375, %376 : vector<8x32xf32>
    %378 = math.tanh %377 : vector<8x32xf32>
    %379 = arith.mulf %374, %378 : vector<8x32xf32>
    %380 = arith.maximumf %314, %379 : vector<8x32xf32>
    %381 = vector.extract_strided_slice %44 {offsets = [48, 0], sizes = [8, 128], strides = [1, 1]} : vector<64x128xf32> to vector<8x128xf32>
    %382 = arith.truncf %335 : vector<8x32xf32> to vector<8x32xbf16>
    %cst_81 = arith.constant dense<0.000000e+00> : vector<8x128xf32>
    %383 = tpu.matmul %382, %45, %cst_81 {dimension_numbers = #tpu.dot_dimension_numbers<[1], [0], [0], [1], [0, 0, 1, 1], [], []>} : vector<8x32xbf16>, vector<32x128xbf16>, vector<8x128xf32> -> vector<8x128xf32>
    %384 = arith.addf %381, %383 : vector<8x128xf32>
    %385 = vector.broadcast %55 : vector<1x128xf32> to vector<8x128xf32>
    %386 = arith.mulf %384, %385 : vector<8x128xf32>
    %387 = math.tanh %386 : vector<8x128xf32>
    %388 = vector.extract_strided_slice %387 {offsets = [0, 0], sizes = [8, 96], strides = [1, 1]} : vector<8x128xf32> to vector<8x96xf32>
    %cst_82 = arith.constant 5.000000e-01 : f32
    %389 = vector.broadcast %cst_82 : f32 to vector<8x96xf32>
    %390 = arith.mulf %389, %388 : vector<8x96xf32>
    %cst_83 = arith.constant 5.000000e-01 : f32
    %391 = vector.broadcast %cst_83 : f32 to vector<8x96xf32>
    %392 = arith.addf %390, %391 : vector<8x96xf32>
    %393 = vector.extract_strided_slice %387 {offsets = [0, 96], sizes = [8, 32], strides = [1, 1]} : vector<8x128xf32> to vector<8x32xf32>
    %394 = vector.extract_strided_slice %392 {offsets = [0, 0], sizes = [8, 32], strides = [1, 1]} : vector<8x96xf32> to vector<8x32xf32>
    %395 = vector.extract_strided_slice %392 {offsets = [0, 32], sizes = [8, 32], strides = [1, 1]} : vector<8x96xf32> to vector<8x32xf32>
    %396 = vector.extract_strided_slice %392 {offsets = [0, 64], sizes = [8, 32], strides = [1, 1]} : vector<8x96xf32> to vector<8x32xf32>
    %397 = arith.mulf %395, %333 : vector<8x32xf32>
    %398 = arith.mulf %394, %393 : vector<8x32xf32>
    %399 = arith.addf %397, %398 : vector<8x32xf32>
    %400 = math.tanh %399 : vector<8x32xf32>
    %401 = arith.mulf %396, %400 : vector<8x32xf32>
    %402 = tpu.concatenate %335, %357 in 1 : vector<8x32xf32>, vector<8x32xf32> -> vector<8x64xf32>
    %403 = arith.truncf %402 : vector<8x64xf32> to vector<8x64xbf16>
    %cst_84 = arith.constant dense<0.000000e+00> : vector<8x128xf32>
    %404 = tpu.matmul %403, %46, %cst_84 {dimension_numbers = #tpu.dot_dimension_numbers<[1], [0], [0], [1], [0, 0, 1, 1], [], []>} : vector<8x64xbf16>, vector<64x128xbf16>, vector<8x128xf32> -> vector<8x128xf32>
    %405 = vector.broadcast %48 : vector<1x128xf32> to vector<8x128xf32>
    %406 = arith.addf %404, %405 : vector<8x128xf32>
    %407 = vector.broadcast %55 : vector<1x128xf32> to vector<8x128xf32>
    %408 = arith.mulf %406, %407 : vector<8x128xf32>
    %409 = math.tanh %408 : vector<8x128xf32>
    %410 = vector.extract_strided_slice %409 {offsets = [0, 0], sizes = [8, 96], strides = [1, 1]} : vector<8x128xf32> to vector<8x96xf32>
    %cst_85 = arith.constant 5.000000e-01 : f32
    %411 = vector.broadcast %cst_85 : f32 to vector<8x96xf32>
    %412 = arith.mulf %411, %410 : vector<8x96xf32>
    %cst_86 = arith.constant 5.000000e-01 : f32
    %413 = vector.broadcast %cst_86 : f32 to vector<8x96xf32>
    %414 = arith.addf %412, %413 : vector<8x96xf32>
    %415 = vector.extract_strided_slice %409 {offsets = [0, 96], sizes = [8, 32], strides = [1, 1]} : vector<8x128xf32> to vector<8x32xf32>
    %416 = vector.extract_strided_slice %414 {offsets = [0, 0], sizes = [8, 32], strides = [1, 1]} : vector<8x96xf32> to vector<8x32xf32>
    %417 = vector.extract_strided_slice %414 {offsets = [0, 32], sizes = [8, 32], strides = [1, 1]} : vector<8x96xf32> to vector<8x32xf32>
    %418 = vector.extract_strided_slice %414 {offsets = [0, 64], sizes = [8, 32], strides = [1, 1]} : vector<8x96xf32> to vector<8x32xf32>
    %419 = arith.mulf %417, %355 : vector<8x32xf32>
    %420 = arith.mulf %416, %415 : vector<8x32xf32>
    %421 = arith.addf %419, %420 : vector<8x32xf32>
    %422 = math.tanh %421 : vector<8x32xf32>
    %423 = arith.mulf %418, %422 : vector<8x32xf32>
    %424 = tpu.concatenate %357, %379 in 1 : vector<8x32xf32>, vector<8x32xf32> -> vector<8x64xf32>
    %425 = arith.truncf %424 : vector<8x64xf32> to vector<8x64xbf16>
    %cst_87 = arith.constant dense<0.000000e+00> : vector<8x128xf32>
    %426 = tpu.matmul %425, %47, %cst_87 {dimension_numbers = #tpu.dot_dimension_numbers<[1], [0], [0], [1], [0, 0, 1, 1], [], []>} : vector<8x64xbf16>, vector<64x128xbf16>, vector<8x128xf32> -> vector<8x128xf32>
    %427 = vector.broadcast %49 : vector<1x128xf32> to vector<8x128xf32>
    %428 = arith.addf %426, %427 : vector<8x128xf32>
    %429 = vector.broadcast %55 : vector<1x128xf32> to vector<8x128xf32>
    %430 = arith.mulf %428, %429 : vector<8x128xf32>
    %431 = math.tanh %430 : vector<8x128xf32>
    %432 = vector.extract_strided_slice %431 {offsets = [0, 0], sizes = [8, 96], strides = [1, 1]} : vector<8x128xf32> to vector<8x96xf32>
    %cst_88 = arith.constant 5.000000e-01 : f32
    %433 = vector.broadcast %cst_88 : f32 to vector<8x96xf32>
    %434 = arith.mulf %433, %432 : vector<8x96xf32>
    %cst_89 = arith.constant 5.000000e-01 : f32
    %435 = vector.broadcast %cst_89 : f32 to vector<8x96xf32>
    %436 = arith.addf %434, %435 : vector<8x96xf32>
    %437 = vector.extract_strided_slice %431 {offsets = [0, 96], sizes = [8, 32], strides = [1, 1]} : vector<8x128xf32> to vector<8x32xf32>
    %438 = vector.extract_strided_slice %436 {offsets = [0, 0], sizes = [8, 32], strides = [1, 1]} : vector<8x96xf32> to vector<8x32xf32>
    %439 = vector.extract_strided_slice %436 {offsets = [0, 32], sizes = [8, 32], strides = [1, 1]} : vector<8x96xf32> to vector<8x32xf32>
    %440 = vector.extract_strided_slice %436 {offsets = [0, 64], sizes = [8, 32], strides = [1, 1]} : vector<8x96xf32> to vector<8x32xf32>
    %441 = arith.mulf %439, %377 : vector<8x32xf32>
    %442 = arith.mulf %438, %437 : vector<8x32xf32>
    %443 = arith.addf %441, %442 : vector<8x32xf32>
    %444 = math.tanh %443 : vector<8x32xf32>
    %445 = arith.mulf %440, %444 : vector<8x32xf32>
    %446 = arith.maximumf %380, %445 : vector<8x32xf32>
    %447 = vector.extract_strided_slice %44 {offsets = [56, 0], sizes = [8, 128], strides = [1, 1]} : vector<64x128xf32> to vector<8x128xf32>
    %448 = arith.truncf %401 : vector<8x32xf32> to vector<8x32xbf16>
    %cst_90 = arith.constant dense<0.000000e+00> : vector<8x128xf32>
    %449 = tpu.matmul %448, %45, %cst_90 {dimension_numbers = #tpu.dot_dimension_numbers<[1], [0], [0], [1], [0, 0, 1, 1], [], []>} : vector<8x32xbf16>, vector<32x128xbf16>, vector<8x128xf32> -> vector<8x128xf32>
    %450 = arith.addf %447, %449 : vector<8x128xf32>
    %451 = vector.broadcast %55 : vector<1x128xf32> to vector<8x128xf32>
    %452 = arith.mulf %450, %451 : vector<8x128xf32>
    %453 = math.tanh %452 : vector<8x128xf32>
    %454 = vector.extract_strided_slice %453 {offsets = [0, 0], sizes = [8, 96], strides = [1, 1]} : vector<8x128xf32> to vector<8x96xf32>
    %cst_91 = arith.constant 5.000000e-01 : f32
    %455 = vector.broadcast %cst_91 : f32 to vector<8x96xf32>
    %456 = arith.mulf %455, %454 : vector<8x96xf32>
    %cst_92 = arith.constant 5.000000e-01 : f32
    %457 = vector.broadcast %cst_92 : f32 to vector<8x96xf32>
    %458 = arith.addf %456, %457 : vector<8x96xf32>
    %459 = vector.extract_strided_slice %453 {offsets = [0, 96], sizes = [8, 32], strides = [1, 1]} : vector<8x128xf32> to vector<8x32xf32>
    %460 = vector.extract_strided_slice %458 {offsets = [0, 0], sizes = [8, 32], strides = [1, 1]} : vector<8x96xf32> to vector<8x32xf32>
    %461 = vector.extract_strided_slice %458 {offsets = [0, 32], sizes = [8, 32], strides = [1, 1]} : vector<8x96xf32> to vector<8x32xf32>
    %462 = vector.extract_strided_slice %458 {offsets = [0, 64], sizes = [8, 32], strides = [1, 1]} : vector<8x96xf32> to vector<8x32xf32>
    %463 = arith.mulf %461, %399 : vector<8x32xf32>
    %464 = arith.mulf %460, %459 : vector<8x32xf32>
    %465 = arith.addf %463, %464 : vector<8x32xf32>
    %466 = math.tanh %465 : vector<8x32xf32>
    %467 = arith.mulf %462, %466 : vector<8x32xf32>
    %468 = tpu.concatenate %401, %423 in 1 : vector<8x32xf32>, vector<8x32xf32> -> vector<8x64xf32>
    %469 = arith.truncf %468 : vector<8x64xf32> to vector<8x64xbf16>
    %cst_93 = arith.constant dense<0.000000e+00> : vector<8x128xf32>
    %470 = tpu.matmul %469, %46, %cst_93 {dimension_numbers = #tpu.dot_dimension_numbers<[1], [0], [0], [1], [0, 0, 1, 1], [], []>} : vector<8x64xbf16>, vector<64x128xbf16>, vector<8x128xf32> -> vector<8x128xf32>
    %471 = vector.broadcast %48 : vector<1x128xf32> to vector<8x128xf32>
    %472 = arith.addf %470, %471 : vector<8x128xf32>
    %473 = vector.broadcast %55 : vector<1x128xf32> to vector<8x128xf32>
    %474 = arith.mulf %472, %473 : vector<8x128xf32>
    %475 = math.tanh %474 : vector<8x128xf32>
    %476 = vector.extract_strided_slice %475 {offsets = [0, 0], sizes = [8, 96], strides = [1, 1]} : vector<8x128xf32> to vector<8x96xf32>
    %cst_94 = arith.constant 5.000000e-01 : f32
    %477 = vector.broadcast %cst_94 : f32 to vector<8x96xf32>
    %478 = arith.mulf %477, %476 : vector<8x96xf32>
    %cst_95 = arith.constant 5.000000e-01 : f32
    %479 = vector.broadcast %cst_95 : f32 to vector<8x96xf32>
    %480 = arith.addf %478, %479 : vector<8x96xf32>
    %481 = vector.extract_strided_slice %475 {offsets = [0, 96], sizes = [8, 32], strides = [1, 1]} : vector<8x128xf32> to vector<8x32xf32>
    %482 = vector.extract_strided_slice %480 {offsets = [0, 0], sizes = [8, 32], strides = [1, 1]} : vector<8x96xf32> to vector<8x32xf32>
    %483 = vector.extract_strided_slice %480 {offsets = [0, 32], sizes = [8, 32], strides = [1, 1]} : vector<8x96xf32> to vector<8x32xf32>
    %484 = vector.extract_strided_slice %480 {offsets = [0, 64], sizes = [8, 32], strides = [1, 1]} : vector<8x96xf32> to vector<8x32xf32>
    %485 = arith.mulf %483, %421 : vector<8x32xf32>
    %486 = arith.mulf %482, %481 : vector<8x32xf32>
    %487 = arith.addf %485, %486 : vector<8x32xf32>
    %488 = math.tanh %487 : vector<8x32xf32>
    %489 = arith.mulf %484, %488 : vector<8x32xf32>
    %490 = tpu.concatenate %423, %445 in 1 : vector<8x32xf32>, vector<8x32xf32> -> vector<8x64xf32>
    %491 = arith.truncf %490 : vector<8x64xf32> to vector<8x64xbf16>
    %cst_96 = arith.constant dense<0.000000e+00> : vector<8x128xf32>
    %492 = tpu.matmul %491, %47, %cst_96 {dimension_numbers = #tpu.dot_dimension_numbers<[1], [0], [0], [1], [0, 0, 1, 1], [], []>} : vector<8x64xbf16>, vector<64x128xbf16>, vector<8x128xf32> -> vector<8x128xf32>
    %493 = vector.broadcast %49 : vector<1x128xf32> to vector<8x128xf32>
    %494 = arith.addf %492, %493 : vector<8x128xf32>
    %495 = vector.broadcast %55 : vector<1x128xf32> to vector<8x128xf32>
    %496 = arith.mulf %494, %495 : vector<8x128xf32>
    %497 = math.tanh %496 : vector<8x128xf32>
    %498 = vector.extract_strided_slice %497 {offsets = [0, 0], sizes = [8, 96], strides = [1, 1]} : vector<8x128xf32> to vector<8x96xf32>
    %cst_97 = arith.constant 5.000000e-01 : f32
    %499 = vector.broadcast %cst_97 : f32 to vector<8x96xf32>
    %500 = arith.mulf %499, %498 : vector<8x96xf32>
    %cst_98 = arith.constant 5.000000e-01 : f32
    %501 = vector.broadcast %cst_98 : f32 to vector<8x96xf32>
    %502 = arith.addf %500, %501 : vector<8x96xf32>
    %503 = vector.extract_strided_slice %497 {offsets = [0, 96], sizes = [8, 32], strides = [1, 1]} : vector<8x128xf32> to vector<8x32xf32>
    %504 = vector.extract_strided_slice %502 {offsets = [0, 0], sizes = [8, 32], strides = [1, 1]} : vector<8x96xf32> to vector<8x32xf32>
    %505 = vector.extract_strided_slice %502 {offsets = [0, 32], sizes = [8, 32], strides = [1, 1]} : vector<8x96xf32> to vector<8x32xf32>
    %506 = vector.extract_strided_slice %502 {offsets = [0, 64], sizes = [8, 32], strides = [1, 1]} : vector<8x96xf32> to vector<8x32xf32>
    %507 = arith.mulf %505, %443 : vector<8x32xf32>
    %508 = arith.mulf %504, %503 : vector<8x32xf32>
    %509 = arith.addf %507, %508 : vector<8x32xf32>
    %510 = math.tanh %509 : vector<8x32xf32>
    %511 = arith.mulf %506, %510 : vector<8x32xf32>
    %512 = arith.maximumf %446, %511 : vector<8x32xf32>
    %513 = tpu.concatenate %467, %489 in 1 : vector<8x32xf32>, vector<8x32xf32> -> vector<8x64xf32>
    %514 = arith.truncf %513 : vector<8x64xf32> to vector<8x64xbf16>
    %cst_99 = arith.constant dense<0.000000e+00> : vector<8x128xf32>
    %515 = tpu.matmul %514, %46, %cst_99 {dimension_numbers = #tpu.dot_dimension_numbers<[1], [0], [0], [1], [0, 0, 1, 1], [], []>} : vector<8x64xbf16>, vector<64x128xbf16>, vector<8x128xf32> -> vector<8x128xf32>
    %516 = vector.broadcast %48 : vector<1x128xf32> to vector<8x128xf32>
    %517 = arith.addf %515, %516 : vector<8x128xf32>
    %518 = vector.broadcast %55 : vector<1x128xf32> to vector<8x128xf32>
    %519 = arith.mulf %517, %518 : vector<8x128xf32>
    %520 = math.tanh %519 : vector<8x128xf32>
    %521 = vector.extract_strided_slice %520 {offsets = [0, 0], sizes = [8, 96], strides = [1, 1]} : vector<8x128xf32> to vector<8x96xf32>
    %cst_100 = arith.constant 5.000000e-01 : f32
    %522 = vector.broadcast %cst_100 : f32 to vector<8x96xf32>
    %523 = arith.mulf %522, %521 : vector<8x96xf32>
    %cst_101 = arith.constant 5.000000e-01 : f32
    %524 = vector.broadcast %cst_101 : f32 to vector<8x96xf32>
    %525 = arith.addf %523, %524 : vector<8x96xf32>
    %526 = vector.extract_strided_slice %520 {offsets = [0, 96], sizes = [8, 32], strides = [1, 1]} : vector<8x128xf32> to vector<8x32xf32>
    %527 = vector.extract_strided_slice %525 {offsets = [0, 0], sizes = [8, 32], strides = [1, 1]} : vector<8x96xf32> to vector<8x32xf32>
    %528 = vector.extract_strided_slice %525 {offsets = [0, 32], sizes = [8, 32], strides = [1, 1]} : vector<8x96xf32> to vector<8x32xf32>
    %529 = vector.extract_strided_slice %525 {offsets = [0, 64], sizes = [8, 32], strides = [1, 1]} : vector<8x96xf32> to vector<8x32xf32>
    %530 = arith.mulf %528, %487 : vector<8x32xf32>
    %531 = arith.mulf %527, %526 : vector<8x32xf32>
    %532 = arith.addf %530, %531 : vector<8x32xf32>
    %533 = math.tanh %532 : vector<8x32xf32>
    %534 = arith.mulf %529, %533 : vector<8x32xf32>
    %535 = tpu.concatenate %489, %511 in 1 : vector<8x32xf32>, vector<8x32xf32> -> vector<8x64xf32>
    %536 = arith.truncf %535 : vector<8x64xf32> to vector<8x64xbf16>
    %cst_102 = arith.constant dense<0.000000e+00> : vector<8x128xf32>
    %537 = tpu.matmul %536, %47, %cst_102 {dimension_numbers = #tpu.dot_dimension_numbers<[1], [0], [0], [1], [0, 0, 1, 1], [], []>} : vector<8x64xbf16>, vector<64x128xbf16>, vector<8x128xf32> -> vector<8x128xf32>
    %538 = vector.broadcast %49 : vector<1x128xf32> to vector<8x128xf32>
    %539 = arith.addf %537, %538 : vector<8x128xf32>
    %540 = vector.broadcast %55 : vector<1x128xf32> to vector<8x128xf32>
    %541 = arith.mulf %539, %540 : vector<8x128xf32>
    %542 = math.tanh %541 : vector<8x128xf32>
    %543 = vector.extract_strided_slice %542 {offsets = [0, 0], sizes = [8, 96], strides = [1, 1]} : vector<8x128xf32> to vector<8x96xf32>
    %cst_103 = arith.constant 5.000000e-01 : f32
    %544 = vector.broadcast %cst_103 : f32 to vector<8x96xf32>
    %545 = arith.mulf %544, %543 : vector<8x96xf32>
    %cst_104 = arith.constant 5.000000e-01 : f32
    %546 = vector.broadcast %cst_104 : f32 to vector<8x96xf32>
    %547 = arith.addf %545, %546 : vector<8x96xf32>
    %548 = vector.extract_strided_slice %542 {offsets = [0, 96], sizes = [8, 32], strides = [1, 1]} : vector<8x128xf32> to vector<8x32xf32>
    %549 = vector.extract_strided_slice %547 {offsets = [0, 0], sizes = [8, 32], strides = [1, 1]} : vector<8x96xf32> to vector<8x32xf32>
    %550 = vector.extract_strided_slice %547 {offsets = [0, 32], sizes = [8, 32], strides = [1, 1]} : vector<8x96xf32> to vector<8x32xf32>
    %551 = vector.extract_strided_slice %547 {offsets = [0, 64], sizes = [8, 32], strides = [1, 1]} : vector<8x96xf32> to vector<8x32xf32>
    %552 = arith.mulf %550, %509 : vector<8x32xf32>
    %553 = arith.mulf %549, %548 : vector<8x32xf32>
    %554 = arith.addf %552, %553 : vector<8x32xf32>
    %555 = math.tanh %554 : vector<8x32xf32>
    %556 = arith.mulf %551, %555 : vector<8x32xf32>
    %557 = arith.maximumf %512, %556 : vector<8x32xf32>
    %558 = tpu.concatenate %534, %556 in 1 : vector<8x32xf32>, vector<8x32xf32> -> vector<8x64xf32>
    %559 = arith.truncf %558 : vector<8x64xf32> to vector<8x64xbf16>
    %cst_105 = arith.constant dense<0.000000e+00> : vector<8x128xf32>
    %560 = tpu.matmul %559, %47, %cst_105 {dimension_numbers = #tpu.dot_dimension_numbers<[1], [0], [0], [1], [0, 0, 1, 1], [], []>} : vector<8x64xbf16>, vector<64x128xbf16>, vector<8x128xf32> -> vector<8x128xf32>
    %561 = vector.broadcast %49 : vector<1x128xf32> to vector<8x128xf32>
    %562 = arith.addf %560, %561 : vector<8x128xf32>
    %563 = vector.broadcast %55 : vector<1x128xf32> to vector<8x128xf32>
    %564 = arith.mulf %562, %563 : vector<8x128xf32>
    %565 = math.tanh %564 : vector<8x128xf32>
    %566 = vector.extract_strided_slice %565 {offsets = [0, 0], sizes = [8, 96], strides = [1, 1]} : vector<8x128xf32> to vector<8x96xf32>
    %cst_106 = arith.constant 5.000000e-01 : f32
    %567 = vector.broadcast %cst_106 : f32 to vector<8x96xf32>
    %568 = arith.mulf %567, %566 : vector<8x96xf32>
    %cst_107 = arith.constant 5.000000e-01 : f32
    %569 = vector.broadcast %cst_107 : f32 to vector<8x96xf32>
    %570 = arith.addf %568, %569 : vector<8x96xf32>
    %571 = vector.extract_strided_slice %565 {offsets = [0, 96], sizes = [8, 32], strides = [1, 1]} : vector<8x128xf32> to vector<8x32xf32>
    %572 = vector.extract_strided_slice %570 {offsets = [0, 0], sizes = [8, 32], strides = [1, 1]} : vector<8x96xf32> to vector<8x32xf32>
    %573 = vector.extract_strided_slice %570 {offsets = [0, 32], sizes = [8, 32], strides = [1, 1]} : vector<8x96xf32> to vector<8x32xf32>
    %574 = vector.extract_strided_slice %570 {offsets = [0, 64], sizes = [8, 32], strides = [1, 1]} : vector<8x96xf32> to vector<8x32xf32>
    %575 = arith.mulf %573, %554 : vector<8x32xf32>
    %576 = arith.mulf %572, %571 : vector<8x32xf32>
    %577 = arith.addf %575, %576 : vector<8x32xf32>
    %578 = math.tanh %577 : vector<8x32xf32>
    %579 = arith.mulf %574, %578 : vector<8x32xf32>
    %580 = arith.maximumf %557, %579 : vector<8x32xf32>
    %581 = arith.truncf %580 : vector<8x32xf32> to vector<8x32xbf16>
    %c0_108 = arith.constant 0 : index
    %c0_109 = arith.constant 0 : index
    %582 = vector.load %arg12[%c0_108, %c0_109] : memref<32x4xbf16, #tpu.memory_space<vmem>>, vector<32x4xbf16>
    %cst_110 = arith.constant dense<0.000000e+00> : vector<8x4xf32>
    %583 = tpu.matmul %581, %582, %cst_110 {dimension_numbers = #tpu.dot_dimension_numbers<[1], [0], [0], [1], [0, 0, 1, 1], [], []>} : vector<8x32xbf16>, vector<32x4xbf16>, vector<8x4xf32> -> vector<8x4xf32>
    %c0_111 = arith.constant 0 : index
    %c0_112 = arith.constant 0 : index
    %584 = vector.load %arg13[%c0_111, %c0_112] : memref<1x4xf32, #tpu.memory_space<vmem>>, vector<1x4xf32>
    %585 = vector.broadcast %584 : vector<1x4xf32> to vector<8x4xf32>
    %586 = arith.addf %583, %585 : vector<8x4xf32>
    %587 = vector.extract_strided_slice %586 {offsets = [0, 0], sizes = [2, 4], strides = [1, 1]} : vector<8x4xf32> to vector<2x4xf32>
    %c0_113 = arith.constant 0 : index
    %c0_114 = arith.constant 0 : index
    %588 = vector.load %arg14[%c0_113, %c0_114] : memref<2x4xf32, #tpu.memory_space<vmem>>, vector<2x4xf32>
    tpu.vector_store %arg14[%c0_113, %c0_114], %587 {strides = array<i32>} : memref<2x4xf32, #tpu.memory_space<vmem>>, vector<2x4xf32>,
    return
  }
}

</mosaic_0001>

<llo_original>
// kernel: tpu_custom_call.1
$region0: #{tpu_custom_call.1}
  #allocation0 [shape = 'u32[]', space=smem, size = 0x4, offset = 0x4, fixed_abs, tag = 'smem constant byte address 0x4 - core index']
  #allocation1 [shape = 'u32[72,128]{1,0:T(1,128)}', space=vmem, size = 0x9000, scoped, tag = 'internal scratch']
  %s0 = inlined_call_operand.vmem [shape: bf16[64,16], index: 0, kind: input, shape index: {}]
  %s1 = inlined_call_operand.hbm [shape: bf16[16,32], index: 1, kind: input, shape index: {}]
  %s2 = inlined_call_operand.vmem [shape: f32[1,32], index: 2, kind: input, shape index: {}]
  %s3 = inlined_call_operand.vmem [shape: f32[1,32], index: 3, kind: input, shape index: {}]
  %s4 = inlined_call_operand.vmem [shape: f32[1,32], index: 4, kind: input, shape index: {}]
  %s5 = inlined_call_operand.vmem [shape: bf16[32,128], index: 5, kind: input, shape index: {}]
  %s6 = inlined_call_operand.hbm [shape: bf16[32,128], index: 6, kind: input, shape index: {}]
  %s7 = inlined_call_operand.vmem [shape: f32[1,128], index: 7, kind: input, shape index: {}]
  %s8 = inlined_call_operand.vmem [shape: bf16[64,128], index: 8, kind: input, shape index: {}]
  %s9 = inlined_call_operand.vmem [shape: f32[1,128], index: 9, kind: input, shape index: {}]
  %s10 = inlined_call_operand.hbm [shape: bf16[64,128], index: 10, kind: input, shape index: {}]
  %s11 = inlined_call_operand.vmem [shape: f32[1,128], index: 11, kind: input, shape index: {}]
  %s12 = inlined_call_operand.vmem [shape: bf16[32,4], index: 12, kind: input, shape index: {}]
  %s13 = inlined_call_operand.vmem [shape: f32[1,4], index: 13, kind: input, shape index: {}]
  %s14 = inlined_call_operand.hbm [shape: f32[2,4], index: 14, kind: output, shape index: {}]
  %s15 = sld [smem:[#allocation0]]
  $region78: #{tpu_custom_call.1} parent=0
    _
  %s17 = ssub.s32 1, %s15
  %s18 = scalar_select 0, %s17, %s15
  $region1: #{tpu_custom_call.1} parent=0
    #allocation2 [shape = 'u8[4096]{0}', space=vmem, size = 0x1000, scoped, tag = 'input window, operand 1, single buffered']
    #allocation3 [shape = 's32[1]{0}', space=sflag, size = 0x4, scoped, tag = 'scoped memory for tpu_custom_call.1']
    #allocation4 [shape = 's32[1]{0}', space=sflag, size = 0x4, scoped, tag = 'scoped memory for tpu_custom_call.1']
    #allocation5 [shape = 'u8[8192]{0}', space=vmem, size = 0x2000, scoped, tag = 'input window, operand 6, single buffered']
    #allocation6 [shape = 's32[1]{0}', space=sflag, size = 0x4, scoped, tag = 'scoped memory for tpu_custom_call.1']
    #allocation7 [shape = 'u8[16384]{0}', space=vmem, size = 0x4000, scoped, tag = 'input window, operand 10, single buffered']
    #allocation8 [shape = 'u8[1024]{0}', space=vmem, size = 0x400, scoped, tag = 'output window, operand 0, single buffered']
    %19 = vsyncpa [#allocation3], 0
    %20 = vsyncpa [#allocation6], 0
    %21 = vsyncpa [#allocation4], 0
    // Predicated region
    $region2: #{tpu_custom_call.1} parent=1 // pred_check
      _
    $region3: #{tpu_custom_call.1} parent=1 // pred_check_branch
      %23 = sbr.rel (0) target = $region5
    $region4: #{tpu_custom_call.1} parent=1 // pred_region
      _
    $region5: #{tpu_custom_call.1} parent=1 // pred_fallthru
      _
    // Predicated region
    $region6: #{tpu_custom_call.1} parent=1 // pred_check
      _
    $region7: #{tpu_custom_call.1} parent=1 // pred_check_branch
      %25 = sbr.rel (0) target = $region9
    $region8: #{tpu_custom_call.1} parent=1 // pred_region
      %27 = vsyncadd [#allocation3], 0
      %s28 = sshll.u32 %s1, 4
      %s29 = int_to_ptr.hbm [resolvable:$true] %s28
      %s30 = sshll.u32 [#allocation2], 4
      %s31 = int_to_ptr.vmem [resolvable:$true] %s30
      %36 = dma.hbm_to_vmem [thread:$0]  %s29, 128, %s31, [#allocation3], 64, 64, 4
    $region9: #{tpu_custom_call.1} parent=1 // pred_fallthru
      _
    // Predicated region
    $region10: #{tpu_custom_call.1} parent=1 // pred_check
      _
    $region11: #{tpu_custom_call.1} parent=1 // pred_check_branch
      %38 = sbr.rel (0) target = $region13
    $region12: #{tpu_custom_call.1} parent=1 // pred_region
      _
    $region13: #{tpu_custom_call.1} parent=1 // pred_fallthru
      _
    // Predicated region
    $region14: #{tpu_custom_call.1} parent=1 // pred_check
      _
    $region15: #{tpu_custom_call.1} parent=1 // pred_check_branch
      %40 = sbr.rel (0) target = $region17
    $region16: #{tpu_custom_call.1} parent=1 // pred_region
      _
    $region17: #{tpu_custom_call.1} parent=1 // pred_fallthru
      _
    // Predicated region
    $region18: #{tpu_custom_call.1} parent=1 // pred_check
      _
    $region19: #{tpu_custom_call.1} parent=1 // pred_check_branch
      %42 = sbr.rel (0) target = $region21
    $region20: #{tpu_custom_call.1} parent=1 // pred_region
      _
    $region21: #{tpu_custom_call.1} parent=1 // pred_fallthru
      _
    // Predicated region
    $region22: #{tpu_custom_call.1} parent=1 // pred_check
      _
    $region23: #{tpu_custom_call.1} parent=1 // pred_check_branch
      %44 = sbr.rel (0) target = $region25
    $region24: #{tpu_custom_call.1} parent=1 // pred_region
      _
    $region25: #{tpu_custom_call.1} parent=1 // pred_fallthru
      _
    // Predicated region
    $region26: #{tpu_custom_call.1} parent=1 // pred_check
      _
    $region27: #{tpu_custom_call.1} parent=1 // pred_check_branch
      %46 = sbr.rel (0) target = $region29
    $region28: #{tpu_custom_call.1} parent=1 // pred_region
      %48 = vsyncadd [#allocation6], 0
      %s49 = sshll.u32 %s6, 4
      %s50 = int_to_ptr.hbm [resolvable:$true] %s49
      %s51 = sshll.u32 [#allocation5], 4
      %s52 = int_to_ptr.vmem [resolvable:$true] %s51
      %57 = dma.hbm_to_vmem [thread:$0]  %s50, 256, %s52, [#allocation6], 64, 64, 4
    $region29: #{tpu_custom_call.1} parent=1 // pred_fallthru
      _
    // Predicated region
    $region30: #{tpu_custom_call.1} parent=1 // pred_check
      _
    $region31: #{tpu_custom_call.1} parent=1 // pred_check_branch
      %59 = sbr.rel (0) target = $region33
    $region32: #{tpu_custom_call.1} parent=1 // pred_region
      _
    $region33: #{tpu_custom_call.1} parent=1 // pred_fallthru
      _
    // Predicated region
    $region34: #{tpu_custom_call.1} parent=1 // pred_check
      _
    $region35: #{tpu_custom_call.1} parent=1 // pred_check_branch
      %61 = sbr.rel (0) target = $region37
    $region36: #{tpu_custom_call.1} parent=1 // pred_region
      _
    $region37: #{tpu_custom_call.1} parent=1 // pred_fallthru
      _
    // Predicated region
    $region38: #{tpu_custom_call.1} parent=1 // pred_check
      _
    $region39: #{tpu_custom_call.1} parent=1 // pred_check_branch
      %63 = sbr.rel (0) target = $region41
    $region40: #{tpu_custom_call.1} parent=1 // pred_region
      _
    $region41: #{tpu_custom_call.1} parent=1 // pred_fallthru
      _
    // Predicated region
    $region42: #{tpu_custom_call.1} parent=1 // pred_check
      _
    $region43: #{tpu_custom_call.1} parent=1 // pred_check_branch
      %65 = sbr.rel (0) target = $region45
    $region44: #{tpu_custom_call.1} parent=1 // pred_region
      %67 = vsyncadd [#allocation6], 0
      %s68 = sshll.u32 %s10, 4
      %s69 = int_to_ptr.hbm [resolvable:$true] %s68
      %s70 = sshll.u32 [#allocation7], 4
      %s71 = int_to_ptr.vmem [resolvable:$true] %s70
      %76 = dma.hbm_to_vmem [thread:$0]  %s69, 512, %s71, [#allocation6], 64, 64, 4
    $region45: #{tpu_custom_call.1} parent=1 // pred_fallthru
      _
    // Predicated region
    $region46: #{tpu_custom_call.1} parent=1 // pred_check
      _
    $region47: #{tpu_custom_call.1} parent=1 // pred_check_branch
      %78 = sbr.rel (0) target = $region49
    $region48: #{tpu_custom_call.1} parent=1 // pred_region
      _
    $region49: #{tpu_custom_call.1} parent=1 // pred_fallthru
      _
    // Predicated region
    $region50: #{tpu_custom_call.1} parent=1 // pred_check
      _
    $region51: #{tpu_custom_call.1} parent=1 // pred_check_branch
      %80 = sbr.rel (0) target = $region53
    $region52: #{tpu_custom_call.1} parent=1 // pred_region
      _
    $region53: #{tpu_custom_call.1} parent=1 // pred_fallthru
      _
    // Predicated region
    $region54: #{tpu_custom_call.1} parent=1 // pred_check
      _
    $region55: #{tpu_custom_call.1} parent=1 // pred_check_branch
      %82 = sbr.rel (0) target = $region57
    $region56: #{tpu_custom_call.1} parent=1 // pred_region
      _
    $region57: #{tpu_custom_call.1} parent=1 // pred_fallthru
      _
    // Predicated region
    $region58: #{tpu_custom_call.1} parent=1 // pred_check
      _
    $region59: #{tpu_custom_call.1} parent=1 // pred_check_branch
      %84 = sbr.rel (0) target = $region61
    $region60: #{tpu_custom_call.1} parent=1 // pred_region
      %86 = dma.done [#allocation3], 128
    $region61: #{tpu_custom_call.1} parent=1 // pred_fallthru
      _
    // Predicated region
    $region62: #{tpu_custom_call.1} parent=1 // pred_check
      _
    $region63: #{tpu_custom_call.1} parent=1 // pred_check_branch
      %88 = sbr.rel (0) target = $region65
    $region64: #{tpu_custom_call.1} parent=1 // pred_region
      %90 = dma.done [#allocation6], 256
    $region65: #{tpu_custom_call.1} parent=1 // pred_fallthru
      _
    // Predicated region
    $region66: #{tpu_custom_call.1} parent=1 // pred_check
      _
    $region67: #{tpu_custom_call.1} parent=1 // pred_check_branch
      %92 = sbr.rel (0) target = $region69
    $region68: #{tpu_custom_call.1} parent=1 // pred_region
      %94 = dma.done [#allocation6], 512
    $region69: #{tpu_custom_call.1} parent=1 // pred_fallthru
      _
    %v96 = vld [vmem:[%s0] sm:$0xf]
    %v97 = vld [vmem:[%s0 + $0x4] sm:$0xf]
    %v98 = vld [vmem:[%s0 + $0x8] sm:$0xf]
    %v99 = vld [vmem:[%s0 + $0xc] sm:$0xf]
    %v100 = vld [vmem:[%s0 + $0x10] sm:$0xf]
    %v101 = vld [vmem:[%s0 + $0x14] sm:$0xf]
    %v102 = vld [vmem:[%s0 + $0x18] sm:$0xf]
    %v103 = vld [vmem:[%s0 + $0x1c] sm:$0xf]
    %v104 = vld [vmem:[#allocation2] sm:$0xf]
    %v105 = vld [vmem:[#allocation2 + $0x4] sm:$0xf]
    %v106 = vld [vmem:[%s2] sm:$0x1]
    %v108 = vperm.slane %v106, 0
    %v118 = vunpack.c.l.b16 %v96
    %v119 = vunpack.c.l.b16 %v97
    %v120 = vunpack.c.l.b16 %v98
    %v121 = vunpack.c.l.b16 %v99
    %v122 = vunpack.c.l.b16 %v100
    %v123 = vunpack.c.l.b16 %v101
    %v124 = vunpack.c.l.b16 %v102
    %v125 = vunpack.c.l.b16 %v103
    %v126 = vpack.c.b16 %v119, %v118
    %v127 = vpack.c.b16 %v121, %v120
    %v128 = vpack.c.b16 %v123, %v122
    %v129 = vpack.c.b16 %v125, %v124
    %v132 = vunpack.c.l.b16 %v104
    %v133 = vunpack.c.l.b16 %v105
    %v134 = vpack.c.b16 %v133, %v132
    %vm136 = vcmask 130048
    %v138 = vsel %vm136, %v126, 0
    %v141 = vsel %vm136, %v127, 0
    %v144 = vsel %vm136, %v128, 0
    %v147 = vsel %vm136, %v129, 0
    %149 = vmatpush.bf16.msra.mxu0 0
    %150 = vmatpush.bf16.msra.mxu0 0
    %151 = vmatpush.bf16.msra.mxu0 0
    %152 = vmatpush.bf16.msra.mxu0 0
    %153 = vmatpush.bf16.msra.mxu0 0
    %154 = vmatpush.bf16.msra.mxu0 0
    %155 = vmatpush.bf16.msra.mxu0 0
    %156 = vmatpush.bf16.msra.mxu0 %v134
    %157 = vmatmul.bf16.gmra.mxu0 %v138
    %v158 = vpop.f32.mrf.mxu0
    %v159 = vadd.f32 %v108, %v158
    %v160 = vpop.f32.mrf.mxu0
    %v161 = vadd.f32 %v108, %v160
    %162 = vmatmul.bf16.gmra.mxu0 %v141
    %v163 = vpop.f32.mrf.mxu0
    %v164 = vadd.f32 %v108, %v163
    %v165 = vpop.f32.mrf.mxu0
    %v166 = vadd.f32 %v108, %v165
    %167 = vmatmul.bf16.gmra.mxu0 %v144
    %v168 = vpop.f32.mrf.mxu0
    %v169 = vadd.f32 %v108, %v168
    %v170 = vpop.f32.mrf.mxu0
    %v171 = vadd.f32 %v108, %v170
    %172 = vmatmul.bf16.gmra.mxu0 %v147
    %v173 = vpop.f32.mrf.mxu0
    %v174 = vadd.f32 %v108, %v173
    %v175 = vpop.f32.mrf.mxu0
    %v176 = vadd.f32 %v108, %v175
    %177 = vdwg.mxu0
    %vm178 = vcmask 261120
    %v179 = vsel %vm178, %v159, 0.0
    %v180 = vsel %vm178, %v161, 0.0
    %v181 = vadd.f32 %v179, %v180
    %v182 = vsel %vm178, %v164, 0.0
    %v183 = vadd.f32 %v181, %v182
    %v184 = vsel %vm178, %v166, 0.0
    %v185 = vadd.f32 %v183, %v184
    %v186 = vsel %vm178, %v169, 0.0
    %v187 = vadd.f32 %v185, %v186
    %v188 = vsel %vm178, %v171, 0.0
    %v189 = vadd.f32 %v187, %v188
    %v190 = vsel %vm178, %v174, 0.0
    %v191 = vadd.f32 %v189, %v190
    %v192 = vsel %vm178, %v176, 0.0
    %v193 = vadd.f32 %v191, %v192
    %v194 = vrot.slane %v193, 4
    %v195 = vadd.f32 %v193, %v194
    %v196 = vrot.slane %v195, 2
    %v197 = vadd.f32 %v195, %v196
    %v198 = vrot.slane %v197, 1
    %v199 = vadd.f32 %v197, %v198
    %v200 = vmul.f32 %v159, %v159
    %v201 = vmul.f32 %v161, %v161
    %v202 = vmul.f32 %v164, %v164
    %v203 = vmul.f32 %v166, %v166
    %v204 = vmul.f32 %v169, %v169
    %v205 = vmul.f32 %v171, %v171
    %v206 = vmul.f32 %v174, %v174
    %v207 = vmul.f32 %v176, %v176
    %v208 = vsel %vm178, %v200, 0.0
    %v209 = vsel %vm178, %v201, 0.0
    %v210 = vadd.f32 %v208, %v209
    %v211 = vsel %vm178, %v202, 0.0
    %v212 = vadd.f32 %v210, %v211
    %v213 = vsel %vm178, %v203, 0.0
    %v214 = vadd.f32 %v212, %v213
    %v215 = vsel %vm178, %v204, 0.0
    %v216 = vadd.f32 %v214, %v215
    %v217 = vsel %vm178, %v205, 0.0
    %v218 = vadd.f32 %v216, %v217
    %v219 = vsel %vm178, %v206, 0.0
    %v220 = vadd.f32 %v218, %v219
    %v221 = vsel %vm178, %v207, 0.0
    %v222 = vadd.f32 %v220, %v221
    %v223 = vrot.slane %v222, 4
    %v224 = vadd.f32 %v222, %v223
    %v225 = vrot.slane %v224, 2
    %v226 = vadd.f32 %v224, %v225
    %v227 = vrot.slane %v226, 1
    %v228 = vadd.f32 %v226, %v227
    %v229 = vmul.f32 %v106, 48.0
    %v230 = vsub.f32 %v199, %v229
    %v231 = vrcp.pop 16.0
    %v232 = vmul.f32 16.0, %v231
    %v233 = vsub.f32 1.0, %v232
    %v234 = vmul.f32 %v231, %v233
    %v235 = vadd.f32 %v231, %v234
    %vm236 = vweird.f32 %v231
    %v237 = vsel %vm236, %v231, %v235
    %v238 = vmul.f32 %v230, %v237
    %v239 = vmul.f32 %v106, %v106
    %v240 = vmul.f32 %v239, 48.0
    %v241 = vsub.f32 %v228, %v240
    %v242 = vmul.f32 %v241, %v237
    %v243 = vmul.f32 %v238, %v238
    %v244 = vsub.f32 %v242, %v243
    %v245 = vmax.f32 %v244, 0.0
    %v246 = vld [vmem:[%s3] sm:$0x1]
    %v247 = vadd.f32 %v245, 1e-05
    %v248 = vrsqrt.pop %v247
    %v249 = vmul.f32 %v248, %v247
    %v250 = vmul.f32 %v249, %v248
    %v251 = vmul.f32 0.5, %v250
    %v252 = vsub.f32 1.5, %v251
    %v253 = vmul.f32 %v248, %v252
    %vm254 = vweird.f32 %v247
    %vm255 = vweird.f32 %v248
    %vm256 = vmor %vm254, %vm255
    %v257 = vsel %vm256, %v248, %v253
    %v258 = vmul.f32 %v246, %v257
    %v259 = vld [vmem:[%s4] sm:$0x1]
    %v260 = vmul.f32 %v238, %v258
    %v261 = vsub.f32 %v259, %v260
    %v263 = vperm.slane %v258, 0
    %v265 = vmul.f32 %v159, %v263
    %v266 = vmul.f32 %v161, %v263
    %v267 = vmul.f32 %v164, %v263
    %v268 = vmul.f32 %v166, %v263
    %v269 = vmul.f32 %v169, %v263
    %v270 = vmul.f32 %v171, %v263
    %v271 = vmul.f32 %v174, %v263
    %v272 = vmul.f32 %v176, %v263
    %v274 = vperm.slane %v261, 0
    %v276 = vadd.f32 %v265, %v274
    %v277 = vadd.f32 %v266, %v274
    %v278 = vadd.f32 %v267, %v274
    %v279 = vadd.f32 %v268, %v274
    %v280 = vadd.f32 %v269, %v274
    %v281 = vadd.f32 %v270, %v274
    %v282 = vadd.f32 %v271, %v274
    %v283 = vadd.f32 %v272, %v274
    %v284 = vpack.c.bf16 %v277, %v276
    %v285 = vpack.c.bf16 %v279, %v278
    %v286 = vpack.c.bf16 %v281, %v280
    %v287 = vpack.c.bf16 %v283, %v282
    %v288 = vld [vmem:[%s5] sm:$0xf]
    %v289 = vld [vmem:[%s5 + $0x4] sm:$0xf]
    %v290 = vld [vmem:[%s5 + $0x8] sm:$0xf]
    %v291 = vld [vmem:[%s5 + $0xc] sm:$0xf]
    %v292 = vld [vmem:[%s7] sm:$0x1]
    %v294 = vperm.slane %v292, 0
    %v300 = vunpack.c.l.b16 %v288
    %v301 = vunpack.c.l.b16 %v289
    %v302 = vunpack.c.l.b16 %v290
    %v303 = vunpack.c.l.b16 %v291
    %v304 = vpack.c.b16 %v301, %v300
    %v305 = vpack.c.b16 %v303, %v302
    %v309 = vsel %vm178, %v284, 0
    %v312 = vsel %vm178, %v285, 0
    %v315 = vsel %vm178, %v286, 0
    %v318 = vsel %vm178, %v287, 0
    %320 = vmatpush.bf16.msra.mxu0 0
    %321 = vmatpush.bf16.msra.mxu0 0
    %322 = vmatpush.bf16.msra.mxu0 0
    %323 = vmatpush.bf16.msra.mxu0 0
    %324 = vmatpush.bf16.msra.mxu0 0
    %325 = vmatpush.bf16.msra.mxu0 0
    %326 = vmatpush.bf16.msra.mxu0 %v305
    %327 = vmatpush.bf16.msra.mxu0 %v304
    %328 = vmatmul.bf16.gmra.mxu0 %v309
    %v329 = vpop.f32.mrf.mxu0
    %v330 = vadd.f32 %v294, %v329
    %v331 = vpop.f32.mrf.mxu0
    %v332 = vadd.f32 %v294, %v331
    %333 = vmatmul.bf16.gmra.mxu0 %v312
    %v334 = vpop.f32.mrf.mxu0
    %v335 = vadd.f32 %v294, %v334
    %v336 = vpop.f32.mrf.mxu0
    %v337 = vadd.f32 %v294, %v336
    %338 = vmatmul.bf16.gmra.mxu0 %v315
    %v339 = vpop.f32.mrf.mxu0
    %v340 = vadd.f32 %v294, %v339
    %v341 = vpop.f32.mrf.mxu0
    %v342 = vadd.f32 %v294, %v341
    %343 = vmatmul.bf16.gmra.mxu0 %v318
    %v344 = vpop.f32.mrf.mxu0
    %v345 = vadd.f32 %v294, %v344
    %v346 = vpop.f32.mrf.mxu0
    %v347 = vadd.f32 %v294, %v346
    %348 = vdwg.mxu0
    %v349 = vld [vmem:[#allocation5] sm:$0xf]
    %v350 = vld [vmem:[#allocation5 + $0x4] sm:$0xf]
    %v351 = vld [vmem:[#allocation5 + $0x8] sm:$0xf]
    %v352 = vld [vmem:[#allocation5 + $0xc] sm:$0xf]
    %v353 = vld [vmem:[%s8] sm:$0xf]
    %v354 = vld [vmem:[%s8 + $0x4] sm:$0xf]
    %v355 = vld [vmem:[%s8 + $0x8] sm:$0xf]
    %v356 = vld [vmem:[%s8 + $0xc] sm:$0xf]
    %v357 = vld [vmem:[%s8 + $0x10] sm:$0xf]
    %v358 = vld [vmem:[%s8 + $0x14] sm:$0xf]
    %v359 = vld [vmem:[%s8 + $0x18] sm:$0xf]
    %v360 = vld [vmem:[%s8 + $0x1c] sm:$0xf]
    %v361 = vld [vmem:[#allocation7] sm:$0xf]
    %v362 = vld [vmem:[#allocation7 + $0x4] sm:$0xf]
    %v363 = vld [vmem:[#allocation7 + $0x8] sm:$0xf]
    %v364 = vld [vmem:[#allocation7 + $0xc] sm:$0xf]
    %v365 = vld [vmem:[#allocation7 + $0x10] sm:$0xf]
    %v366 = vld [vmem:[#allocation7 + $0x14] sm:$0xf]
    %v367 = vld [vmem:[#allocation7 + $0x18] sm:$0xf]
    %v368 = vld [vmem:[#allocation7 + $0x1c] sm:$0xf]
    %v369 = vld [vmem:[%s9] sm:$0x1]
    %v370 = vld [vmem:[%s11] sm:$0x1]
    %v371 = vlaneseq
    %v372 = vand.u32 %v371, 127
    %vm373 = vcmp.lt.s32.totalorder %v372, 96
    %v374 = vsel %vm373, 0.5, 1.0
    %v375 = vmul.f32 %v330, %v374
    %v376 = vtanh.pop %v375
    %v377 = vmul.f32 %v376, 0.5
    %v378 = vadd.f32 %v377, 0.5
    %v379 = vmul.f32 %v378, 0.0
    %381 = vrot.lane.b32.xlu0 %v376, 32
    %v382 = vpop.permute.xlu0 %381
    %v384 = vmul.f32 %v378, %v382
    %386 = vrot.lane.b32.xlu0 %v384, 32
    %v387 = vpop.permute.xlu0 %386
    %v389 = vadd.f32 %v379, %v387
    %v390 = vtanh.pop %v389
    %392 = vrot.lane.b32.xlu0 %v390, 32
    %v393 = vpop.permute.xlu0 %392
    %v395 = vmul.f32 %v378, %v393
    %v396 = vpack.c.bf16 %v395, %v395
    %398 = vrot.lane.b32.xlu0 %v396, 64
    %v399 = vpop.permute.xlu0 %398
    %v404 = vunpack.c.l.b16 %v349
    %v405 = vunpack.c.l.b16 %v350
    %v406 = vunpack.c.l.b16 %v351
    %v407 = vunpack.c.l.b16 %v352
    %v408 = vpack.c.b16 %v405, %v404
    %v409 = vpack.c.b16 %v407, %v406
    %v413 = vsel %vm178, %v399, 0
    %415 = vmatpush.bf16.msra.mxu0 0
    %416 = vmatpush.bf16.msra.mxu0 0
    %417 = vmatpush.bf16.msra.mxu0 0
    %418 = vmatpush.bf16.msra.mxu0 0
    %419 = vmatpush.bf16.msra.mxu0 0
    %420 = vmatpush.bf16.msra.mxu0 0
    %421 = vmatpush.bf16.msra.mxu0 %v409
    %422 = vmatpush.bf16.msra.mxu0 %v408
    %423 = vmatmul.bf16.gmra.mxu0 %v413
    %v424 = vpop.f32.mrf.mxu0
    %v425 = vadd.f32 0.0, %v424
    %v426 = vpop.f32.mrf.mxu0
    %427 = vdwg.mxu0
    %v428 = vadd.f32 %v332, %v425
    %v429 = vmul.f32 %v428, %v374
    %v430 = vtanh.pop %v429
    %v431 = vmul.f32 %v430, 0.5
    %v432 = vadd.f32 %v431, 0.5
    %v433 = vmul.f32 %v432, %v389
    %435 = vrot.lane.b32.xlu0 %v430, 32
    %v436 = vpop.permute.xlu0 %435
    %v438 = vmul.f32 %v432, %v436
    %440 = vrot.lane.b32.xlu0 %v438, 32
    %v441 = vpop.permute.xlu0 %440
    %v443 = vadd.f32 %v433, %v441
    %v444 = vtanh.pop %v443
    %446 = vrot.lane.b32.xlu0 %v444, 32
    %v447 = vpop.permute.xlu0 %446
    %v449 = vmul.f32 %v432, %v447
    %451 = vrot.lane.b32.xlu0 %v395, 64
    %v452 = vpop.permute.xlu0 %451
    %v454 = vsel %vm178, %v452, 0.0
    %v455 = vpack.c.bf16 %v454, %v454
    %v457 = vperm.slane %v369, 0
    %v467 = vunpack.c.l.b16 %v353
    %v468 = vunpack.c.l.b16 %v354
    %v469 = vunpack.c.l.b16 %v355
    %v470 = vunpack.c.l.b16 %v356
    %v471 = vunpack.c.l.b16 %v357
    %v472 = vunpack.c.l.b16 %v358
    %v473 = vunpack.c.l.b16 %v359
    %v474 = vunpack.c.l.b16 %v360
    %v475 = vpack.c.b16 %v468, %v467
    %v476 = vpack.c.b16 %v470, %v469
    %v477 = vpack.c.b16 %v472, %v471
    %v478 = vpack.c.b16 %v474, %v473
    %vm483 = vcmask 523264
    %v485 = vsel %vm483, %v455, 0
    %487 = vmatpush.bf16.msra.mxu0 0
    %488 = vmatpush.bf16.msra.mxu0 0
    %489 = vmatpush.bf16.msra.mxu0 0
    %490 = vmatpush.bf16.msra.mxu0 0
    %491 = vmatpush.bf16.msra.mxu0 %v478
    %492 = vmatpush.bf16.msra.mxu0 %v477
    %493 = vmatpush.bf16.msra.mxu0 %v476
    %494 = vmatpush.bf16.msra.mxu0 %v475
    %495 = vmatmul.bf16.gmra.mxu0 %v485
    %v496 = vpop.f32.mrf.mxu0
    %v497 = vadd.f32 %v457, %v496
    %v498 = vpop.f32.mrf.mxu0
    %499 = vdwg.mxu0
    %v500 = vmul.f32 %v497, %v374
    %v501 = vtanh.pop %v500
    %v502 = vmul.f32 %v501, 0.5
    %v503 = vadd.f32 %v502, 0.5
    %v504 = vmul.f32 %v503, 0.0
    %506 = vrot.lane.b32.xlu0 %v501, 32
    %v507 = vpop.permute.xlu0 %506
    %v509 = vmul.f32 %v503, %v507
    %511 = vrot.lane.b32.xlu0 %v509, 32
    %v512 = vpop.permute.xlu0 %511
    %v514 = vadd.f32 %v504, %v512
    %v515 = vtanh.pop %v514
    %517 = vrot.lane.b32.xlu0 %v515, 32
    %v518 = vpop.permute.xlu0 %517
    %v520 = vmul.f32 %v503, %v518
    %v521 = vpack.c.bf16 %v449, %v449
    %523 = vrot.lane.b32.xlu0 %v521, 64
    %v524 = vpop.permute.xlu0 %523
    %v526 = vsel %vm178, %v524, 0
    %528 = vmatpush.bf16.msra.mxu0 0
    %529 = vmatpush.bf16.msra.mxu0 0
    %530 = vmatpush.bf16.msra.mxu0 0
    %531 = vmatpush.bf16.msra.mxu0 0
    %532 = vmatpush.bf16.msra.mxu0 0
    %533 = vmatpush.bf16.msra.mxu0 0
    %534 = vmatpush.bf16.msra.mxu0 %v409
    %535 = vmatpush.bf16.msra.mxu0 %v408
    %536 = vmatmul.bf16.gmra.mxu0 %v526
    %v537 = vpop.f32.mrf.mxu0
    %v538 = vadd.f32 0.0, %v537
    %v539 = vpop.f32.mrf.mxu0
    %540 = vdwg.mxu0
    %v541 = vadd.f32 %v335, %v538
    %v542 = vmul.f32 %v541, %v374
    %v543 = vtanh.pop %v542
    %v544 = vmul.f32 %v543, 0.5
    %v545 = vadd.f32 %v544, 0.5
    %v546 = vmul.f32 %v545, %v443
    %548 = vrot.lane.b32.xlu0 %v543, 32
    %v549 = vpop.permute.xlu0 %548
    %v551 = vmul.f32 %v545, %v549
    %553 = vrot.lane.b32.xlu0 %v551, 32
    %v554 = vpop.permute.xlu0 %553
    %v556 = vadd.f32 %v546, %v554
    %v557 = vtanh.pop %v556
    %559 = vrot.lane.b32.xlu0 %v557, 32
    %v560 = vpop.permute.xlu0 %559
    %v562 = vmul.f32 %v545, %v560
    %564 = vrot.lane.b32.xlu0 %v449, 64
    %v565 = vpop.permute.xlu0 %564
    %568 = vrot.lane.b32.xlu0 %v520, 96
    %v569 = vpop.permute.xlu0 %568
    %v571 = vsel %vm178, %v565, %v569
    %v572 = vpack.c.bf16 %v571, %v571
    %v574 = vsel %vm483, %v572, 0
    %576 = vmatpush.bf16.msra.mxu0 0
    %577 = vmatpush.bf16.msra.mxu0 0
    %578 = vmatpush.bf16.msra.mxu0 0
    %579 = vmatpush.bf16.msra.mxu0 0
    %580 = vmatpush.bf16.msra.mxu0 %v478
    %581 = vmatpush.bf16.msra.mxu0 %v477
    %582 = vmatpush.bf16.msra.mxu0 %v476
    %583 = vmatpush.bf16.msra.mxu0 %v475
    %584 = vmatmul.bf16.gmra.mxu0 %v574
    %v585 = vpop.f32.mrf.mxu0
    %v586 = vadd.f32 %v457, %v585
    %v587 = vpop.f32.mrf.mxu0
    %588 = vdwg.mxu0
    %v589 = vmul.f32 %v586, %v374
    %v590 = vtanh.pop %v589
    %v591 = vmul.f32 %v590, 0.5
    %v592 = vadd.f32 %v591, 0.5
    %v593 = vmul.f32 %v592, %v514
    %595 = vrot.lane.b32.xlu0 %v590, 32
    %v596 = vpop.permute.xlu0 %595
    %v598 = vmul.f32 %v592, %v596
    %600 = vrot.lane.b32.xlu0 %v598, 32
    %v601 = vpop.permute.xlu0 %600
    %v603 = vadd.f32 %v593, %v601
    %v604 = vtanh.pop %v603
    %606 = vrot.lane.b32.xlu0 %v604, 32
    %v607 = vpop.permute.xlu0 %606
    %v609 = vmul.f32 %v592, %v607
    %610 = vrot.lane.b32.xlu0 %v520, 64
    %v611 = vpop.permute.xlu0 %610
    %v613 = vsel %vm178, %v611, 0.0
    %v614 = vpack.c.bf16 %v613, %v613
    %v616 = vperm.slane %v370, 0
    %v626 = vunpack.c.l.b16 %v361
    %v627 = vunpack.c.l.b16 %v362
    %v628 = vunpack.c.l.b16 %v363
    %v629 = vunpack.c.l.b16 %v364
    %v630 = vunpack.c.l.b16 %v365
    %v631 = vunpack.c.l.b16 %v366
    %v632 = vunpack.c.l.b16 %v367
    %v633 = vunpack.c.l.b16 %v368
    %v634 = vpack.c.b16 %v627, %v626
    %v635 = vpack.c.b16 %v629, %v628
    %v636 = vpack.c.b16 %v631, %v630
    %v637 = vpack.c.b16 %v633, %v632
    %v643 = vsel %vm483, %v614, 0
    %645 = vmatpush.bf16.msra.mxu0 0
    %646 = vmatpush.bf16.msra.mxu0 0
    %647 = vmatpush.bf16.msra.mxu0 0
    %648 = vmatpush.bf16.msra.mxu0 0
    %649 = vmatpush.bf16.msra.mxu0 %v637
    %650 = vmatpush.bf16.msra.mxu0 %v636
    %651 = vmatpush.bf16.msra.mxu0 %v635
    %652 = vmatpush.bf16.msra.mxu0 %v634
    %653 = vmatmul.bf16.gmra.mxu0 %v643
    %v654 = vpop.f32.mrf.mxu0
    %v655 = vadd.f32 %v616, %v654
    %v656 = vpop.f32.mrf.mxu0
    %657 = vdwg.mxu0
    %v658 = vmul.f32 %v655, %v374
    %v659 = vtanh.pop %v658
    %v660 = vmul.f32 %v659, 0.5
    %v661 = vadd.f32 %v660, 0.5
    %v662 = vmul.f32 %v661, 0.0
    %664 = vrot.lane.b32.xlu0 %v659, 32
    %v665 = vpop.permute.xlu0 %664
    %v667 = vmul.f32 %v661, %v665
    %669 = vrot.lane.b32.xlu0 %v667, 32
    %v670 = vpop.permute.xlu0 %669
    %v672 = vadd.f32 %v662, %v670
    %v673 = vtanh.pop %v672
    %675 = vrot.lane.b32.xlu0 %v673, 32
    %v676 = vpop.permute.xlu0 %675
    %v678 = vmul.f32 %v661, %v676
    %v679 = vpack.c.bf16 %v562, %v562
    %681 = vrot.lane.b32.xlu0 %v679, 64
    %v682 = vpop.permute.xlu0 %681
    %v684 = vsel %vm178, %v682, 0
    %686 = vmatpush.bf16.msra.mxu0 0
    %687 = vmatpush.bf16.msra.mxu0 0
    %688 = vmatpush.bf16.msra.mxu0 0
    %689 = vmatpush.bf16.msra.mxu0 0
    %690 = vmatpush.bf16.msra.mxu0 0
    %691 = vmatpush.bf16.msra.mxu0 0
    %692 = vmatpush.bf16.msra.mxu0 %v409
    %693 = vmatpush.bf16.msra.mxu0 %v408
    %694 = vmatmul.bf16.gmra.mxu0 %v684
    %v695 = vpop.f32.mrf.mxu0
    %v696 = vadd.f32 0.0, %v695
    %v697 = vpop.f32.mrf.mxu0
    %698 = vdwg.mxu0
    %v699 = vadd.f32 %v337, %v696
    %v700 = vmul.f32 %v699, %v374
    %v701 = vtanh.pop %v700
    %v702 = vmul.f32 %v701, 0.5
    %v703 = vadd.f32 %v702, 0.5
    %v704 = vmul.f32 %v703, %v556
    %706 = vrot.lane.b32.xlu0 %v701, 32
    %v707 = vpop.permute.xlu0 %706
    %v709 = vmul.f32 %v703, %v707
    %711 = vrot.lane.b32.xlu0 %v709, 32
    %v712 = vpop.permute.xlu0 %711
    %v714 = vadd.f32 %v704, %v712
    %v715 = vtanh.pop %v714
    %717 = vrot.lane.b32.xlu0 %v715, 32
    %v718 = vpop.permute.xlu0 %717
    %v720 = vmul.f32 %v703, %v718
    %722 = vrot.lane.b32.xlu0 %v562, 64
    %v723 = vpop.permute.xlu0 %722
    %726 = vrot.lane.b32.xlu0 %v609, 96
    %v727 = vpop.permute.xlu0 %726
    %v729 = vsel %vm178, %v723, %v727
    %v730 = vpack.c.bf16 %v729, %v729
    %v732 = vsel %vm483, %v730, 0
    %734 = vmatpush.bf16.msra.mxu0 0
    %735 = vmatpush.bf16.msra.mxu0 0
    %736 = vmatpush.bf16.msra.mxu0 0
    %737 = vmatpush.bf16.msra.mxu0 0
    %738 = vmatpush.bf16.msra.mxu0 %v478
    %739 = vmatpush.bf16.msra.mxu0 %v477
    %740 = vmatpush.bf16.msra.mxu0 %v476
    %741 = vmatpush.bf16.msra.mxu0 %v475
    %742 = vmatmul.bf16.gmra.mxu0 %v732
    %v743 = vpop.f32.mrf.mxu0
    %v744 = vadd.f32 %v457, %v743
    %v745 = vpop.f32.mrf.mxu0
    %746 = vdwg.mxu0
    %v747 = vmul.f32 %v744, %v374
    %v748 = vtanh.pop %v747
    %v749 = vmul.f32 %v748, 0.5
    %v750 = vadd.f32 %v749, 0.5
    %v751 = vmul.f32 %v750, %v603
    %753 = vrot.lane.b32.xlu0 %v748, 32
    %v754 = vpop.permute.xlu0 %753
    %v756 = vmul.f32 %v750, %v754
    %758 = vrot.lane.b32.xlu0 %v756, 32
    %v759 = vpop.permute.xlu0 %758
    %v761 = vadd.f32 %v751, %v759
    %v762 = vtanh.pop %v761
    %764 = vrot.lane.b32.xlu0 %v762, 32
    %v765 = vpop.permute.xlu0 %764
    %v767 = vmul.f32 %v750, %v765
    %768 = vrot.lane.b32.xlu0 %v609, 64
    %v769 = vpop.permute.xlu0 %768
    %772 = vrot.lane.b32.xlu0 %v678, 96
    %v773 = vpop.permute.xlu0 %772
    %v775 = vsel %vm178, %v769, %v773
    %v776 = vpack.c.bf16 %v775, %v775
    %v778 = vsel %vm483, %v776, 0
    %780 = vmatpush.bf16.msra.mxu0 0
    %781 = vmatpush.bf16.msra.mxu0 0
    %782 = vmatpush.bf16.msra.mxu0 0
    %783 = vmatpush.bf16.msra.mxu0 0
    %784 = vmatpush.bf16.msra.mxu0 %v637
    %785 = vmatpush.bf16.msra.mxu0 %v636
    %786 = vmatpush.bf16.msra.mxu0 %v635
    %787 = vmatpush.bf16.msra.mxu0 %v634
    %788 = vmatmul.bf16.gmra.mxu0 %v778
    %v789 = vpop.f32.mrf.mxu0
    %v790 = vadd.f32 %v616, %v789
    %v791 = vpop.f32.mrf.mxu0
    %792 = vdwg.mxu0
    %v793 = vmul.f32 %v790, %v374
    %v794 = vtanh.pop %v793
    %v795 = vmul.f32 %v794, 0.5
    %v796 = vadd.f32 %v795, 0.5
    %v797 = vmul.f32 %v796, %v672
    %799 = vrot.lane.b32.xlu0 %v794, 32
    %v800 = vpop.permute.xlu0 %799
    %v802 = vmul.f32 %v796, %v800
    %804 = vrot.lane.b32.xlu0 %v802, 32
    %v805 = vpop.permute.xlu0 %804
    %v807 = vadd.f32 %v797, %v805
    %v808 = vtanh.pop %v807
    %810 = vrot.lane.b32.xlu0 %v808, 32
    %v811 = vpop.permute.xlu0 %810
    %v813 = vmul.f32 %v796, %v811
    %v814 = vmax.f32 %v678, %v813
    %v815 = vpack.c.bf16 %v720, %v720
    %817 = vrot.lane.b32.xlu0 %v815, 64
    %v818 = vpop.permute.xlu0 %817
    %v820 = vsel %vm178, %v818, 0
    %822 = vmatpush.bf16.msra.mxu0 0
    %823 = vmatpush.bf16.msra.mxu0 0
    %824 = vmatpush.bf16.msra.mxu0 0
    %825 = vmatpush.bf16.msra.mxu0 0
    %826 = vmatpush.bf16.msra.mxu0 0
    %827 = vmatpush.bf16.msra.mxu0 0
    %828 = vmatpush.bf16.msra.mxu0 %v409
    %829 = vmatpush.bf16.msra.mxu0 %v408
    %830 = vmatmul.bf16.gmra.mxu0 %v820
    %v831 = vpop.f32.mrf.mxu0
    %v832 = vadd.f32 0.0, %v831
    %v833 = vpop.f32.mrf.mxu0
    %834 = vdwg.mxu0
    %v835 = vadd.f32 %v340, %v832
    %v836 = vmul.f32 %v835, %v374
    %v837 = vtanh.pop %v836
    %v838 = vmul.f32 %v837, 0.5
    %v839 = vadd.f32 %v838, 0.5
    %v840 = vmul.f32 %v839, %v714
    %842 = vrot.lane.b32.xlu0 %v837, 32
    %v843 = vpop.permute.xlu0 %842
    %v845 = vmul.f32 %v839, %v843
    %847 = vrot.lane.b32.xlu0 %v845, 32
    %v848 = vpop.permute.xlu0 %847
    %v850 = vadd.f32 %v840, %v848
    %v851 = vtanh.pop %v850
    %853 = vrot.lane.b32.xlu0 %v851, 32
    %v854 = vpop.permute.xlu0 %853
    %v856 = vmul.f32 %v839, %v854
    %858 = vrot.lane.b32.xlu0 %v720, 64
    %v859 = vpop.permute.xlu0 %858
    %862 = vrot.lane.b32.xlu0 %v767, 96
    %v863 = vpop.permute.xlu0 %862
    %v865 = vsel %vm178, %v859, %v863
    %v866 = vpack.c.bf16 %v865, %v865
    %v868 = vsel %vm483, %v866, 0
    %870 = vmatpush.bf16.msra.mxu0 0
    %871 = vmatpush.bf16.msra.mxu0 0
    %872 = vmatpush.bf16.msra.mxu0 0
    %873 = vmatpush.bf16.msra.mxu0 0
    %874 = vmatpush.bf16.msra.mxu0 %v478
    %875 = vmatpush.bf16.msra.mxu0 %v477
    %876 = vmatpush.bf16.msra.mxu0 %v476
    %877 = vmatpush.bf16.msra.mxu0 %v475
    %878 = vmatmul.bf16.gmra.mxu0 %v868
    %v879 = vpop.f32.mrf.mxu0
    %v880 = vadd.f32 %v457, %v879
    %v881 = vpop.f32.mrf.mxu0
    %882 = vdwg.mxu0
    %v883 = vmul.f32 %v880, %v374
    %v884 = vtanh.pop %v883
    %v885 = vmul.f32 %v884, 0.5
    %v886 = vadd.f32 %v885, 0.5
    %v887 = vmul.f32 %v886, %v761
    %889 = vrot.lane.b32.xlu0 %v884, 32
    %v890 = vpop.permute.xlu0 %889
    %v892 = vmul.f32 %v886, %v890
    %894 = vrot.lane.b32.xlu0 %v892, 32
    %v895 = vpop.permute.xlu0 %894
    %v897 = vadd.f32 %v887, %v895
    %v898 = vtanh.pop %v897
    %900 = vrot.lane.b32.xlu0 %v898, 32
    %v901 = vpop.permute.xlu0 %900
    %v903 = vmul.f32 %v886, %v901
    %904 = vrot.lane.b32.xlu0 %v767, 64
    %v905 = vpop.permute.xlu0 %904
    %908 = vrot.lane.b32.xlu0 %v813, 96
    %v909 = vpop.permute.xlu0 %908
    %v911 = vsel %vm178, %v905, %v909
    %v912 = vpack.c.bf16 %v911, %v911
    %v914 = vsel %vm483, %v912, 0
    %916 = vmatpush.bf16.msra.mxu0 0
    %917 = vmatpush.bf16.msra.mxu0 0
    %918 = vmatpush.bf16.msra.mxu0 0
    %919 = vmatpush.bf16.msra.mxu0 0
    %920 = vmatpush.bf16.msra.mxu0 %v637
    %921 = vmatpush.bf16.msra.mxu0 %v636
    %922 = vmatpush.bf16.msra.mxu0 %v635
    %923 = vmatpush.bf16.msra.mxu0 %v634
    %924 = vmatmul.bf16.gmra.mxu0 %v914
    %v925 = vpop.f32.mrf.mxu0
    %v926 = vadd.f32 %v616, %v925
    %v927 = vpop.f32.mrf.mxu0
    %928 = vdwg.mxu0
    %v929 = vmul.f32 %v926, %v374
    %v930 = vtanh.pop %v929
    %v931 = vmul.f32 %v930, 0.5
    %v932 = vadd.f32 %v931, 0.5
    %v933 = vmul.f32 %v932, %v807
    %935 = vrot.lane.b32.xlu0 %v930, 32
    %v936 = vpop.permute.xlu0 %935
    %v938 = vmul.f32 %v932, %v936
    %940 = vrot.lane.b32.xlu0 %v938, 32
    %v941 = vpop.permute.xlu0 %940
    %v943 = vadd.f32 %v933, %v941
    %v944 = vtanh.pop %v943
    %946 = vrot.lane.b32.xlu0 %v944, 32
    %v947 = vpop.permute.xlu0 %946
    %v949 = vmul.f32 %v932, %v947
    %v950 = vmax.f32 %v814, %v949
    %v951 = vpack.c.bf16 %v856, %v856
    %953 = vrot.lane.b32.xlu0 %v951, 64
    %v954 = vpop.permute.xlu0 %953
    %v956 = vsel %vm178, %v954, 0
    %958 = vmatpush.bf16.msra.mxu0 0
    %959 = vmatpush.bf16.msra.mxu0 0
    %960 = vmatpush.bf16.msra.mxu0 0
    %961 = vmatpush.bf16.msra.mxu0 0
    %962 = vmatpush.bf16.msra.mxu0 0
    %963 = vmatpush.bf16.msra.mxu0 0
    %964 = vmatpush.bf16.msra.mxu0 %v409
    %965 = vmatpush.bf16.msra.mxu0 %v408
    %966 = vmatmul.bf16.gmra.mxu0 %v956
    %v967 = vpop.f32.mrf.mxu0
    %v968 = vadd.f32 0.0, %v967
    %v969 = vpop.f32.mrf.mxu0
    %970 = vdwg.mxu0
    %v971 = vadd.f32 %v342, %v968
    %v972 = vmul.f32 %v971, %v374
    %v973 = vtanh.pop %v972
    %v974 = vmul.f32 %v973, 0.5
    %v975 = vadd.f32 %v974, 0.5
    %v976 = vmul.f32 %v975, %v850
    %978 = vrot.lane.b32.xlu0 %v973, 32
    %v979 = vpop.permute.xlu0 %978
    %v981 = vmul.f32 %v975, %v979
    %983 = vrot.lane.b32.xlu0 %v981, 32
    %v984 = vpop.permute.xlu0 %983
    %v986 = vadd.f32 %v976, %v984
    %v987 = vtanh.pop %v986
    %989 = vrot.lane.b32.xlu0 %v987, 32
    %v990 = vpop.permute.xlu0 %989
    %v992 = vmul.f32 %v975, %v990
    %994 = vrot.lane.b32.xlu0 %v856, 64
    %v995 = vpop.permute.xlu0 %994
    %998 = vrot.lane.b32.xlu0 %v903, 96
    %v999 = vpop.permute.xlu0 %998
    %v1001 = vsel %vm178, %v995, %v999
    %v1002 = vpack.c.bf16 %v1001, %v1001
    %v1004 = vsel %vm483, %v1002, 0
    %1006 = vmatpush.bf16.msra.mxu0 0
    %1007 = vmatpush.bf16.msra.mxu0 0
    %1008 = vmatpush.bf16.msra.mxu0 0
    %1009 = vmatpush.bf16.msra.mxu0 0
    %1010 = vmatpush.bf16.msra.mxu0 %v478
    %1011 = vmatpush.bf16.msra.mxu0 %v477
    %1012 = vmatpush.bf16.msra.mxu0 %v476
    %1013 = vmatpush.bf16.msra.mxu0 %v475
    %1014 = vmatmul.bf16.gmra.mxu0 %v1004
    %v1015 = vpop.f32.mrf.mxu0
    %v1016 = vadd.f32 %v457, %v1015
    %v1017 = vpop.f32.mrf.mxu0
    %1018 = vdwg.mxu0
    %v1019 = vmul.f32 %v1016, %v374
    %v1020 = vtanh.pop %v1019
    %v1021 = vmul.f32 %v1020, 0.5
    %v1022 = vadd.f32 %v1021, 0.5
    %v1023 = vmul.f32 %v1022, %v897
    %1025 = vrot.lane.b32.xlu0 %v1020, 32
    %v1026 = vpop.permute.xlu0 %1025
    %v1028 = vmul.f32 %v1022, %v1026
    %1030 = vrot.lane.b32.xlu0 %v1028, 32
    %v1031 = vpop.permute.xlu0 %1030
    %v1033 = vadd.f32 %v1023, %v1031
    %v1034 = vtanh.pop %v1033
    %1036 = vrot.lane.b32.xlu0 %v1034, 32
    %v1037 = vpop.permute.xlu0 %1036
    %v1039 = vmul.f32 %v1022, %v1037
    %1040 = vrot.lane.b32.xlu0 %v903, 64
    %v1041 = vpop.permute.xlu0 %1040
    %1044 = vrot.lane.b32.xlu0 %v949, 96
    %v1045 = vpop.permute.xlu0 %1044
    %v1047 = vsel %vm178, %v1041, %v1045
    %v1048 = vpack.c.bf16 %v1047, %v1047
    %v1050 = vsel %vm483, %v1048, 0
    %1052 = vmatpush.bf16.msra.mxu0 0
    %1053 = vmatpush.bf16.msra.mxu0 0
    %1054 = vmatpush.bf16.msra.mxu0 0
    %1055 = vmatpush.bf16.msra.mxu0 0
    %1056 = vmatpush.bf16.msra.mxu0 %v637
    %1057 = vmatpush.bf16.msra.mxu0 %v636
    %1058 = vmatpush.bf16.msra.mxu0 %v635
    %1059 = vmatpush.bf16.msra.mxu0 %v634
    %1060 = vmatmul.bf16.gmra.mxu0 %v1050
    %v1061 = vpop.f32.mrf.mxu0
    %v1062 = vadd.f32 %v616, %v1061
    %v1063 = vpop.f32.mrf.mxu0
    %1064 = vdwg.mxu0
    %v1065 = vmul.f32 %v1062, %v374
    %v1066 = vtanh.pop %v1065
    %v1067 = vmul.f32 %v1066, 0.5
    %v1068 = vadd.f32 %v1067, 0.5
    %v1069 = vmul.f32 %v1068, %v943
    %1071 = vrot.lane.b32.xlu0 %v1066, 32
    %v1072 = vpop.permute.xlu0 %1071
    %v1074 = vmul.f32 %v1068, %v1072
    %1076 = vrot.lane.b32.xlu0 %v1074, 32
    %v1077 = vpop.permute.xlu0 %1076
    %v1079 = vadd.f32 %v1069, %v1077
    %v1080 = vtanh.pop %v1079
    %1082 = vrot.lane.b32.xlu0 %v1080, 32
    %v1083 = vpop.permute.xlu0 %1082
    %v1085 = vmul.f32 %v1068, %v1083
    %v1086 = vmax.f32 %v950, %v1085
    %v1087 = vpack.c.bf16 %v992, %v992
    %1089 = vrot.lane.b32.xlu0 %v1087, 64
    %v1090 = vpop.permute.xlu0 %1089
    %v1092 = vsel %vm178, %v1090, 0
    %1094 = vmatpush.bf16.msra.mxu0 0
    %1095 = vmatpush.bf16.msra.mxu0 0
    %1096 = vmatpush.bf16.msra.mxu0 0
    %1097 = vmatpush.bf16.msra.mxu0 0
    %1098 = vmatpush.bf16.msra.mxu0 0
    %1099 = vmatpush.bf16.msra.mxu0 0
    %1100 = vmatpush.bf16.msra.mxu0 %v409
    %1101 = vmatpush.bf16.msra.mxu0 %v408
    %1102 = vmatmul.bf16.gmra.mxu0 %v1092
    %v1103 = vpop.f32.mrf.mxu0
    %v1104 = vadd.f32 0.0, %v1103
    %v1105 = vpop.f32.mrf.mxu0
    %1106 = vdwg.mxu0
    %v1107 = vadd.f32 %v345, %v1104
    %v1108 = vmul.f32 %v1107, %v374
    %v1109 = vtanh.pop %v1108
    %v1110 = vmul.f32 %v1109, 0.5
    %v1111 = vadd.f32 %v1110, 0.5
    %v1112 = vmul.f32 %v1111, %v986
    %1114 = vrot.lane.b32.xlu0 %v1109, 32
    %v1115 = vpop.permute.xlu0 %1114
    %v1117 = vmul.f32 %v1111, %v1115
    %1119 = vrot.lane.b32.xlu0 %v1117, 32
    %v1120 = vpop.permute.xlu0 %1119
    %v1122 = vadd.f32 %v1112, %v1120
    %v1123 = vtanh.pop %v1122
    %1125 = vrot.lane.b32.xlu0 %v1123, 32
    %v1126 = vpop.permute.xlu0 %1125
    %v1128 = vmul.f32 %v1111, %v1126
    %1130 = vrot.lane.b32.xlu0 %v992, 64
    %v1131 = vpop.permute.xlu0 %1130
    %1134 = vrot.lane.b32.xlu0 %v1039, 96
    %v1135 = vpop.permute.xlu0 %1134
    %v1137 = vsel %vm178, %v1131, %v1135
    %v1138 = vpack.c.bf16 %v1137, %v1137
    %v1140 = vsel %vm483, %v1138, 0
    %1142 = vmatpush.bf16.msra.mxu0 0
    %1143 = vmatpush.bf16.msra.mxu0 0
    %1144 = vmatpush.bf16.msra.mxu0 0
    %1145 = vmatpush.bf16.msra.mxu0 0
    %1146 = vmatpush.bf16.msra.mxu0 %v478
    %1147 = vmatpush.bf16.msra.mxu0 %v477
    %1148 = vmatpush.bf16.msra.mxu0 %v476
    %1149 = vmatpush.bf16.msra.mxu0 %v475
    %1150 = vmatmul.bf16.gmra.mxu0 %v1140
    %v1151 = vpop.f32.mrf.mxu0
    %v1152 = vadd.f32 %v457, %v1151
    %v1153 = vpop.f32.mrf.mxu0
    %1154 = vdwg.mxu0
    %v1155 = vmul.f32 %v1152, %v374
    %v1156 = vtanh.pop %v1155
    %v1157 = vmul.f32 %v1156, 0.5
    %v1158 = vadd.f32 %v1157, 0.5
    %v1159 = vmul.f32 %v1158, %v1033
    %1161 = vrot.lane.b32.xlu0 %v1156, 32
    %v1162 = vpop.permute.xlu0 %1161
    %v1164 = vmul.f32 %v1158, %v1162
    %1166 = vrot.lane.b32.xlu0 %v1164, 32
    %v1167 = vpop.permute.xlu0 %1166
    %v1169 = vadd.f32 %v1159, %v1167
    %v1170 = vtanh.pop %v1169
    %1172 = vrot.lane.b32.xlu0 %v1170, 32
    %v1173 = vpop.permute.xlu0 %1172
    %v1175 = vmul.f32 %v1158, %v1173
    %1176 = vrot.lane.b32.xlu0 %v1039, 64
    %v1177 = vpop.permute.xlu0 %1176
    %1180 = vrot.lane.b32.xlu0 %v1085, 96
    %v1181 = vpop.permute.xlu0 %1180
    %v1183 = vsel %vm178, %v1177, %v1181
    %v1184 = vpack.c.bf16 %v1183, %v1183
    %v1186 = vsel %vm483, %v1184, 0
    %1188 = vmatpush.bf16.msra.mxu0 0
    %1189 = vmatpush.bf16.msra.mxu0 0
    %1190 = vmatpush.bf16.msra.mxu0 0
    %1191 = vmatpush.bf16.msra.mxu0 0
    %1192 = vmatpush.bf16.msra.mxu0 %v637
    %1193 = vmatpush.bf16.msra.mxu0 %v636
    %1194 = vmatpush.bf16.msra.mxu0 %v635
    %1195 = vmatpush.bf16.msra.mxu0 %v634
    %1196 = vmatmul.bf16.gmra.mxu0 %v1186
    %v1197 = vpop.f32.mrf.mxu0
    %v1198 = vadd.f32 %v616, %v1197
    %v1199 = vpop.f32.mrf.mxu0
    %1200 = vdwg.mxu0
    %v1201 = vmul.f32 %v1198, %v374
    %v1202 = vtanh.pop %v1201
    %v1203 = vmul.f32 %v1202, 0.5
    %v1204 = vadd.f32 %v1203, 0.5
    %v1205 = vmul.f32 %v1204, %v1079
    %1207 = vrot.lane.b32.xlu0 %v1202, 32
    %v1208 = vpop.permute.xlu0 %1207
    %v1210 = vmul.f32 %v1204, %v1208
    %1212 = vrot.lane.b32.xlu0 %v1210, 32
    %v1213 = vpop.permute.xlu0 %1212
    %v1215 = vadd.f32 %v1205, %v1213
    %v1216 = vtanh.pop %v1215
    %1218 = vrot.lane.b32.xlu0 %v1216, 32
    %v1219 = vpop.permute.xlu0 %1218
    %v1221 = vmul.f32 %v1204, %v1219
    %v1222 = vmax.f32 %v1086, %v1221
    %v1223 = vpack.c.bf16 %v1128, %v1128
    %1225 = vrot.lane.b32.xlu0 %v1223, 64
    %v1226 = vpop.permute.xlu0 %1225
    %v1228 = vsel %vm178, %v1226, 0
    %1230 = vmatpush.bf16.msra.mxu0 0
    %1231 = vmatpush.bf16.msra.mxu0 0
    %1232 = vmatpush.bf16.msra.mxu0 0
    %1233 = vmatpush.bf16.msra.mxu0 0
    %1234 = vmatpush.bf16.msra.mxu0 0
    %1235 = vmatpush.bf16.msra.mxu0 0
    %1236 = vmatpush.bf16.msra.mxu0 %v409
    %1237 = vmatpush.bf16.msra.mxu0 %v408
    %1238 = vmatmul.bf16.gmra.mxu0 %v1228
    %v1239 = vpop.f32.mrf.mxu0
    %v1240 = vadd.f32 0.0, %v1239
    %v1241 = vpop.f32.mrf.mxu0
    %1242 = vdwg.mxu0
    %v1243 = vadd.f32 %v347, %v1240
    %v1244 = vmul.f32 %v1243, %v374
    %v1245 = vtanh.pop %v1244
    %v1246 = vmul.f32 %v1245, 0.5
    %v1247 = vadd.f32 %v1246, 0.5
    %v1248 = vmul.f32 %v1247, %v1122
    %1250 = vrot.lane.b32.xlu0 %v1245, 32
    %v1251 = vpop.permute.xlu0 %1250
    %v1253 = vmul.f32 %v1247, %v1251
    %1255 = vrot.lane.b32.xlu0 %v1253, 32
    %v1256 = vpop.permute.xlu0 %1255
    %v1258 = vadd.f32 %v1248, %v1256
    %v1259 = vtanh.pop %v1258
    %1261 = vrot.lane.b32.xlu0 %v1259, 32
    %v1262 = vpop.permute.xlu0 %1261
    %v1264 = vmul.f32 %v1247, %v1262
    %1266 = vrot.lane.b32.xlu0 %v1128, 64
    %v1267 = vpop.permute.xlu0 %1266
    %1270 = vrot.lane.b32.xlu0 %v1175, 96
    %v1271 = vpop.permute.xlu0 %1270
    %v1273 = vsel %vm178, %v1267, %v1271
    %v1274 = vpack.c.bf16 %v1273, %v1273
    %v1276 = vsel %vm483, %v1274, 0
    %1278 = vmatpush.bf16.msra.mxu0 0
    %1279 = vmatpush.bf16.msra.mxu0 0
    %1280 = vmatpush.bf16.msra.mxu0 0
    %1281 = vmatpush.bf16.msra.mxu0 0
    %1282 = vmatpush.bf16.msra.mxu0 %v478
    %1283 = vmatpush.bf16.msra.mxu0 %v477
    %1284 = vmatpush.bf16.msra.mxu0 %v476
    %1285 = vmatpush.bf16.msra.mxu0 %v475
    %1286 = vmatmul.bf16.gmra.mxu0 %v1276
    %v1287 = vpop.f32.mrf.mxu0
    %v1288 = vadd.f32 %v457, %v1287
    %v1289 = vpop.f32.mrf.mxu0
    %1290 = vdwg.mxu0
    %v1291 = vmul.f32 %v1288, %v374
    %v1292 = vtanh.pop %v1291
    %v1293 = vmul.f32 %v1292, 0.5
    %v1294 = vadd.f32 %v1293, 0.5
    %v1295 = vmul.f32 %v1294, %v1169
    %1297 = vrot.lane.b32.xlu0 %v1292, 32
    %v1298 = vpop.permute.xlu0 %1297
    %v1300 = vmul.f32 %v1294, %v1298
    %1302 = vrot.lane.b32.xlu0 %v1300, 32
    %v1303 = vpop.permute.xlu0 %1302
    %v1305 = vadd.f32 %v1295, %v1303
    %v1306 = vtanh.pop %v1305
    %1308 = vrot.lane.b32.xlu0 %v1306, 32
    %v1309 = vpop.permute.xlu0 %1308
    %v1311 = vmul.f32 %v1294, %v1309
    %1312 = vrot.lane.b32.xlu0 %v1175, 64
    %v1313 = vpop.permute.xlu0 %1312
    %1316 = vrot.lane.b32.xlu0 %v1221, 96
    %v1317 = vpop.permute.xlu0 %1316
    %v1319 = vsel %vm178, %v1313, %v1317
    %v1320 = vpack.c.bf16 %v1319, %v1319
    %v1322 = vsel %vm483, %v1320, 0
    %1324 = vmatpush.bf16.msra.mxu0 0
    %1325 = vmatpush.bf16.msra.mxu0 0
    %1326 = vmatpush.bf16.msra.mxu0 0
    %1327 = vmatpush.bf16.msra.mxu0 0
    %1328 = vmatpush.bf16.msra.mxu0 %v637
    %1329 = vmatpush.bf16.msra.mxu0 %v636
    %1330 = vmatpush.bf16.msra.mxu0 %v635
    %1331 = vmatpush.bf16.msra.mxu0 %v634
    %1332 = vmatmul.bf16.gmra.mxu0 %v1322
    %v1333 = vpop.f32.mrf.mxu0
    %v1334 = vadd.f32 %v616, %v1333
    %v1335 = vpop.f32.mrf.mxu0
    %1336 = vdwg.mxu0
    %v1337 = vmul.f32 %v1334, %v374
    %v1338 = vtanh.pop %v1337
    %v1339 = vmul.f32 %v1338, 0.5
    %v1340 = vadd.f32 %v1339, 0.5
    %v1341 = vmul.f32 %v1340, %v1215
    %1343 = vrot.lane.b32.xlu0 %v1338, 32
    %v1344 = vpop.permute.xlu0 %1343
    %v1346 = vmul.f32 %v1340, %v1344
    %1348 = vrot.lane.b32.xlu0 %v1346, 32
    %v1349 = vpop.permute.xlu0 %1348
    %v1351 = vadd.f32 %v1341, %v1349
    %v1352 = vtanh.pop %v1351
    %1354 = vrot.lane.b32.xlu0 %v1352, 32
    %v1355 = vpop.permute.xlu0 %1354
    %v1357 = vmul.f32 %v1340, %v1355
    %v1358 = vmax.f32 %v1222, %v1357
    %1360 = vrot.lane.b32.xlu0 %v1264, 64
    %v1361 = vpop.permute.xlu0 %1360
    %1364 = vrot.lane.b32.xlu0 %v1311, 96
    %v1365 = vpop.permute.xlu0 %1364
    %v1367 = vsel %vm178, %v1361, %v1365
    %v1368 = vpack.c.bf16 %v1367, %v1367
    %v1370 = vsel %vm483, %v1368, 0
    %1372 = vmatpush.bf16.msra.mxu0 0
    %1373 = vmatpush.bf16.msra.mxu0 0
    %1374 = vmatpush.bf16.msra.mxu0 0
    %1375 = vmatpush.bf16.msra.mxu0 0
    %1376 = vmatpush.bf16.msra.mxu0 %v478
    %1377 = vmatpush.bf16.msra.mxu0 %v477
    %1378 = vmatpush.bf16.msra.mxu0 %v476
    %1379 = vmatpush.bf16.msra.mxu0 %v475
    %1380 = vmatmul.bf16.gmra.mxu0 %v1370
    %v1381 = vpop.f32.mrf.mxu0
    %v1382 = vadd.f32 %v457, %v1381
    %v1383 = vpop.f32.mrf.mxu0
    %1384 = vdwg.mxu0
    %v1385 = vmul.f32 %v1382, %v374
    %v1386 = vtanh.pop %v1385
    %v1387 = vmul.f32 %v1386, 0.5
    %v1388 = vadd.f32 %v1387, 0.5
    %v1389 = vmul.f32 %v1388, %v1305
    %1391 = vrot.lane.b32.xlu0 %v1386, 32
    %v1392 = vpop.permute.xlu0 %1391
    %v1394 = vmul.f32 %v1388, %v1392
    %1396 = vrot.lane.b32.xlu0 %v1394, 32
    %v1397 = vpop.permute.xlu0 %1396
    %v1399 = vadd.f32 %v1389, %v1397
    %v1400 = vtanh.pop %v1399
    %1402 = vrot.lane.b32.xlu0 %v1400, 32
    %v1403 = vpop.permute.xlu0 %1402
    %v1405 = vmul.f32 %v1388, %v1403
    %1406 = vrot.lane.b32.xlu0 %v1311, 64
    %v1407 = vpop.permute.xlu0 %1406
    %1410 = vrot.lane.b32.xlu0 %v1357, 96
    %v1411 = vpop.permute.xlu0 %1410
    %v1413 = vsel %vm178, %v1407, %v1411
    %v1414 = vpack.c.bf16 %v1413, %v1413
    %v1416 = vsel %vm483, %v1414, 0
    %1418 = vmatpush.bf16.msra.mxu0 0
    %1419 = vmatpush.bf16.msra.mxu0 0
    %1420 = vmatpush.bf16.msra.mxu0 0
    %1421 = vmatpush.bf16.msra.mxu0 0
    %1422 = vmatpush.bf16.msra.mxu0 %v637
    %1423 = vmatpush.bf16.msra.mxu0 %v636
    %1424 = vmatpush.bf16.msra.mxu0 %v635
    %1425 = vmatpush.bf16.msra.mxu0 %v634
    %1426 = vmatmul.bf16.gmra.mxu0 %v1416
    %v1427 = vpop.f32.mrf.mxu0
    %v1428 = vadd.f32 %v616, %v1427
    %v1429 = vpop.f32.mrf.mxu0
    %1430 = vdwg.mxu0
    %v1431 = vmul.f32 %v1428, %v374
    %v1432 = vtanh.pop %v1431
    %v1433 = vmul.f32 %v1432, 0.5
    %v1434 = vadd.f32 %v1433, 0.5
    %v1435 = vmul.f32 %v1434, %v1351
    %1437 = vrot.lane.b32.xlu0 %v1432, 32
    %v1438 = vpop.permute.xlu0 %1437
    %v1440 = vmul.f32 %v1434, %v1438
    %1442 = vrot.lane.b32.xlu0 %v1440, 32
    %v1443 = vpop.permute.xlu0 %1442
    %v1445 = vadd.f32 %v1435, %v1443
    %v1446 = vtanh.pop %v1445
    %1448 = vrot.lane.b32.xlu0 %v1446, 32
    %v1449 = vpop.permute.xlu0 %1448
    %v1451 = vmul.f32 %v1434, %v1449
    %v1452 = vmax.f32 %v1358, %v1451
    %1454 = vrot.lane.b32.xlu0 %v1405, 64
    %v1455 = vpop.permute.xlu0 %1454
    %1458 = vrot.lane.b32.xlu0 %v1451, 96
    %v1459 = vpop.permute.xlu0 %1458
    %v1461 = vsel %vm178, %v1455, %v1459
    %v1462 = vpack.c.bf16 %v1461, %v1461
    %v1464 = vsel %vm483, %v1462, 0
    %1466 = vmatpush.bf16.msra.mxu0 0
    %1467 = vmatpush.bf16.msra.mxu0 0
    %1468 = vmatpush.bf16.msra.mxu0 0
    %1469 = vmatpush.bf16.msra.mxu0 0
    %1470 = vmatpush.bf16.msra.mxu0 %v637
    %1471 = vmatpush.bf16.msra.mxu0 %v636
    %1472 = vmatpush.bf16.msra.mxu0 %v635
    %1473 = vmatpush.bf16.msra.mxu0 %v634
    %1474 = vmatmul.bf16.gmra.mxu0 %v1464
    %v1475 = vpop.f32.mrf.mxu0
    %v1476 = vadd.f32 %v616, %v1475
    %v1477 = vpop.f32.mrf.mxu0
    %1478 = vdwg.mxu0
    %v1479 = vmul.f32 %v1476, %v374
    %v1480 = vtanh.pop %v1479
    %v1481 = vmul.f32 %v1480, 0.5
    %v1482 = vadd.f32 %v1481, 0.5
    %v1483 = vmul.f32 %v1482, %v1445
    %1485 = vrot.lane.b32.xlu0 %v1480, 32
    %v1486 = vpop.permute.xlu0 %1485
    %v1488 = vmul.f32 %v1482, %v1486
    %1490 = vrot.lane.b32.xlu0 %v1488, 32
    %v1491 = vpop.permute.xlu0 %1490
    %v1493 = vadd.f32 %v1483, %v1491
    %v1494 = vtanh.pop %v1493
    %1496 = vrot.lane.b32.xlu0 %v1494, 32
    %v1497 = vpop.permute.xlu0 %1496
    %v1499 = vmul.f32 %v1482, %v1497
    %v1500 = vmax.f32 %v1452, %v1499
    %v1501 = vpack.c.bf16 %v1500, %v1500
    %v1502 = vld [vmem:[%s12] sm:$0xf]
    %v1503 = vld [vmem:[%s12 + $0x4] sm:$0xf]
    %v1504 = vld [vmem:[%s12 + $0x8] sm:$0xf]
    %v1505 = vld [vmem:[%s12 + $0xc] sm:$0xf]
    %v1506 = vld [vmem:[%s13] sm:$0x1]
    %v1508 = vperm.slane %v1506, 0
    %1511 = vrot.lane.b32.xlu0 %v1501, 64
    %v1512 = vpop.permute.xlu0 %1511
    %v1517 = vunpack.c.l.b16 %v1502
    %v1518 = vunpack.c.l.b16 %v1503
    %v1519 = vunpack.c.l.b16 %v1504
    %v1520 = vunpack.c.l.b16 %v1505
    %v1521 = vpack.c.b16 %v1518, %v1517
    %v1522 = vpack.c.b16 %v1520, %v1519
    %v1526 = vsel %vm178, %v1512, 0
    %1528 = vmatpush.bf16.msra.mxu0 0
    %1529 = vmatpush.bf16.msra.mxu0 0
    %1530 = vmatpush.bf16.msra.mxu0 0
    %1531 = vmatpush.bf16.msra.mxu0 0
    %1532 = vmatpush.bf16.msra.mxu0 0
    %1533 = vmatpush.bf16.msra.mxu0 0
    %1534 = vmatpush.bf16.msra.mxu0 %v1522
    %1535 = vmatpush.bf16.msra.mxu0 %v1521
    %1536 = vmatmul.bf16.gmra.mxu0 %v1526
    %v1537 = vpop.f32.mrf.mxu0
    %v1538 = vadd.f32 %v1508, %v1537
    %v1539 = vpop.f32.mrf.mxu0
    %1540 = vdwg.mxu0
    %vm1541 = vcmask 25600
    %1542 = vst.msk [vmem:[#allocation8] sm:$0x3] %vm1541, %v1538
    // Predicated region
    $region70: #{tpu_custom_call.1} parent=1 // pred_check
      _
    $region71: #{tpu_custom_call.1} parent=1 // pred_check_branch
      %1544 = sbr.rel (0) target = $region73
    $region72: #{tpu_custom_call.1} parent=1 // pred_region
      %1546 = vsyncadd [#allocation4], 0
      %s1548 = sshll.u32 [#allocation8], 4
      %s1549 = int_to_ptr.vmem [resolvable:$true] %s1548
      %s1550 = sshll.u32 %s14, 4
      %s1551 = int_to_ptr.hbm [resolvable:$true] %s1550
      %1553 = dma.vmem_to_hbm [thread:$0]  %s1549, 32, %s1551, [#allocation4]
    $region73: #{tpu_custom_call.1} parent=1 // pred_fallthru
      _
    // Predicated region
    $region74: #{tpu_custom_call.1} parent=1 // pred_check
      _
    $region75: #{tpu_custom_call.1} parent=1 // pred_check_branch
      %1555 = sbr.rel (0) target = $region77
    $region76: #{tpu_custom_call.1} parent=1 // pred_region
      %1557 = dma.done [#allocation4], 32
    $region77: #{tpu_custom_call.1} parent=1 // pred_fallthru
      _
    %1558 = vsyncpa [#allocation3], 1
    %1559 = vsyncpa [#allocation6], 1
    %1560 = vsyncpa [#allocation4], 1

</llo_original>
